<compile_context>
chip_gen: v6e
topology: v6e:2x2x1
jax: 0.10.0
libtpu: 0.0.40
codegen_flags: <defaults>
</compile_context>

<pallas_src>
import jax
import jax.numpy as jnp
from jax.experimental import pallas as pl
from jax.experimental.pallas import tpu as pltpu


def _round_up(x, m):
    return ((x + m - 1) // m) * m


# ---------------------------------------------------------------------------
# Pallas kernel: fused (concat -> Linear -> ReLU -> Linear -> ReLU -> Linear
#                       -> L2 normalize).
# * torch.cat is fused in by splitting W1 into one row-block per input part,
#   so the concatenated [B, D_in] activation never round-trips HBM.
# * Dropout layers are identity at inference time (no-op here).
# * The last Linear's output columns are zero-padded to a multiple of 128 so
#   the epilogue store is lane-dense (unmasked vst); padding contributes 0 to
#   the L2 norm and is sliced off in the wrapper.
# * On v6e the weights could additionally be cast to bf16 (f32 accumulation)
#   to halve bytes moved; kept f32 here to match PyTorch f32 semantics exactly.
# ---------------------------------------------------------------------------
def _make_fusion_kernel(n_parts):
    def kernel(*refs):
        x_refs = refs[:n_parts]                      # each [tile_b, d_k]
        w1_refs = refs[n_parts:2 * n_parts]          # each [d_k, H1]
        b1_ref, w2_ref, b2_ref, w3_ref, b3_ref, o_ref = refs[2 * n_parts:]

        # Layer 1: sum of partial matmuls == concat(x_parts) @ W1
        acc = jnp.dot(x_refs[0][...], w1_refs[0][...],
                      preferred_element_type=jnp.float32)
        for x_r, w_r in zip(x_refs[1:], w1_refs[1:]):
            acc = acc + jnp.dot(x_r[...], w_r[...],
                                preferred_element_type=jnp.float32)
        h1 = jnp.maximum(acc + b1_ref[...], 0.0)                       # ReLU

        # Layer 2
        h2 = jnp.maximum(
            jnp.dot(h1, w2_ref[...], preferred_element_type=jnp.float32)
            + b2_ref[...], 0.0)                                        # ReLU

        # Layer 3 (output columns zero-padded to E_pad for lane-dense stores)
        h3 = (jnp.dot(h2, w3_ref[...], preferred_element_type=jnp.float32)
              + b3_ref[...])

        # F.normalize(p=2, dim=-1): x / max(||x||, 1e-12)
        #   == x * rsqrt(max(sum(x^2), 1e-24)) : single EUP rsqrt, no divide,
        # and it also guards the garbage rows of a partial final batch block
        # (those rows are write-masked by Pallas and never reach HBM anyway).
        sumsq = jnp.sum(h3 * h3, axis=-1, keepdims=True)
        inv_norm = jax.lax.rsqrt(jnp.maximum(sumsq, 1e-24))
        o_ref[...] = (h3 * inv_norm).astype(o_ref.dtype)

    return kernel


def user_fusion_forward(embedding_parts, params, *, tile_b=256):
    """Fused forward of UserFusionModel.

    embedding_parts: list of [B, d_k] arrays (behavior / attribute / location);
                     entries may be None, mirroring the optional torch inputs.
    params: (w1, b1, w2, b2, w3, b3) with weights stored [in, out].
    """
    parts = [p for p in embedding_parts if p is not None]
    n_parts = len(parts)
    w1, b1, w2, b2, w3, b3 = params

    B = parts[0].shape[0]
    dims = [int(p.shape[1]) for p in parts]
    D_in = sum(dims)
    H1 = w1.shape[1]
    H2 = w2.shape[1]
    E = w3.shape[1]
    assert w1.shape[0] == D_in, "W1 rows must match sum of part dims"

    # Split W1 rows to mirror the concat layout (fuses the concat into the kernel).
    offs, w1_parts = 0, []
    for d in dims:
        w1_parts.append(w1[offs:offs + d, :])
        offs += d

    # Lane-dense output: pad the final layer to a multiple of 128 columns so the
    # kernel issues unmasked stores; the wrapper slices back to E afterwards.
    E_pad = _round_up(E, 128)
    if E_pad != E:
        w3 = jnp.pad(w3, ((0, 0), (0, E_pad - E)))
        b3 = jnp.pad(b3, ((0, 0), (0, E_pad - E)))

    # Large batch tiles amortize the ~0.35us/step pipeline overhead and fill the
    # MXU M dimension; clamp so a tile never exceeds the (8-rounded) batch.
    # Keep tile_b < B when possible so grid >= 2 and the "parallel" batch axis
    # can shard across both v7x TensorCores.
    tile_b = max(8, min(tile_b, _round_up(B, 8)))
    grid = (pl.cdiv(B, tile_b),)

    in_specs = []
    for d in dims:
        in_specs.append(pl.BlockSpec((tile_b, d), lambda i: (i, 0)))      # x part tile
    for w1_p in w1_parts:
        in_specs.append(pl.BlockSpec(w1_p.shape, lambda i: (0, 0)))       # W1 row-block
    in_specs += [
        pl.BlockSpec((1, H1), lambda i: (0, 0)),        # b1
        pl.BlockSpec((H1, H2), lambda i: (0, 0)),       # W2
        pl.BlockSpec((1, H2), lambda i: (0, 0)),        # b2
        pl.BlockSpec((H2, E_pad), lambda i: (0, 0)),    # W3 (lane-padded)
        pl.BlockSpec((1, E_pad), lambda i: (0, 0)),     # b3 (lane-padded)
    ]
    # NOTE: weight/bias specs are grid-invariant (index_map == (0,0)); total
    # ~26 KB so double-buffering them is negligible at these sizes.

    flops = 2 * B * (D_in * H1 + H1 * H2 + H2 * E_pad)
    bytes_accessed = 4 * (B * D_in + B * E_pad
                          + D_in * H1 + H1 + H1 * H2 + H2 + H2 * E_pad + E_pad)
    cost = pl.CostEstimate(flops=flops, transcendentals=B,
                           bytes_accessed=bytes_accessed)

    out_padded = pl.pallas_call(
        _make_fusion_kernel(n_parts),
        out_shape=jax.ShapeDtypeStruct((B, E_pad), jnp.float32),
        grid_spec=pltpu.PrefetchScalarGridSpec(
            num_scalar_prefetch=0,
            grid=grid,
            in_specs=in_specs,
            out_specs=pl.BlockSpec((tile_b, E_pad), lambda i: (i, 0)),
        ),
        compiler_params=pltpu.CompilerParams(
            # Batch tiles are independent -> megacore sharding on v7x.
            dimension_semantics=("parallel",),
        ),
        cost_estimate=cost,
    )(*parts, *w1_parts, b1, w2, b2, w3, b3)

    return out_padded[:, :E] if E_pad != E else out_padded


# ---------------------------------------------------------------------------
# Deterministic parameter init (xavier_uniform_ weights, zero biases)
# ---------------------------------------------------------------------------
def xavier_uniform(key, fan_in, fan_out):
    limit = jnp.sqrt(6.0 / (fan_in + fan_out))
    # stored as [in, out] so kernel computes x @ W (equiv. to PyTorch x @ W.T)
    return jax.random.uniform(key, (fan_in, fan_out), jnp.float32, -limit, limit)


def make_params(key, input_dim, fusion_hidden_dim, final_embedding_dim):
    k1, k2, k3 = jax.random.split(key, 3)
    h1 = fusion_hidden_dim
    h2 = fusion_hidden_dim // 2
    e = final_embedding_dim
    w1 = xavier_uniform(k1, input_dim, h1)
    b1 = jnp.zeros((1, h1), jnp.float32)
    w2 = xavier_uniform(k2, h1, h2)
    b2 = jnp.zeros((1, h2), jnp.float32)
    w3 = xavier_uniform(k3, h2, e)
    b3 = jnp.zeros((1, e), jnp.float32)
    return (w1, b1, w2, b2, w3, b3)


if __name__ == "__main__":
    # Config analogue
    FUSION_HIDDEN_DIM = 64
    FINAL_USER_EMBEDDING_DIM = 16

    behavior_dim, attribute_dim, location_dim = 32, 16, 16
    batch = 512               # tile_b=256 -> grid of 2 parallel batch tiles
    input_dim = behavior_dim + attribute_dim + location_dim

    key = jax.random.PRNGKey(0)
    kp, kb, ka, kl = jax.random.split(key, 4)
    params = make_params(kp, input_dim, FUSION_HIDDEN_DIM, FINAL_USER_EMBEDDING_DIM)

    behavior = jax.random.normal(kb, (batch, behavior_dim), jnp.float32)
    attribute = jax.random.normal(ka, (batch, attribute_dim), jnp.float32)
    location = jax.random.normal(kl, (batch, location_dim), jnp.float32)

    out = user_fusion_forward([behavior, attribute, location], params, tile_b=256)
    out = jax.block_until_ready(out)

    # Pure-JAX reference check (dropout is identity at inference)
    w1, b1, w2, b2, w3, b3 = params
    x = jnp.concatenate([behavior, attribute, location], axis=-1)
    h = jnp.maximum(x @ w1 + b1, 0.0)
    h = jnp.maximum(h @ w2 + b2, 0.0)
    h = h @ w3 + b3
    ref = h / jnp.maximum(jnp.linalg.norm(h, axis=-1, keepdims=True), 1e-12)

    assert out.shape == (batch, FINAL_USER_EMBEDDING_DIM)
    assert jnp.allclose(out, ref, atol=1e-4, rtol=1e-4), "mismatch vs reference"

    print("KERNEL_OK")
</pallas_src>

<mosaic_0001>
module attributes {stable_mosaic.version = 11 : i64} {
  func.func @kernel(%arg0: i32, %arg1: memref<256x32xf32, #tpu.memory_space<vmem>>, %arg2: memref<256x16xf32, #tpu.memory_space<vmem>>, %arg3: memref<256x16xf32, #tpu.memory_space<vmem>>, %arg4: memref<32x64xf32, #tpu.memory_space<vmem>>, %arg5: memref<16x64xf32, #tpu.memory_space<vmem>>, %arg6: memref<16x64xf32, #tpu.memory_space<vmem>>, %arg7: memref<1x64xf32, #tpu.memory_space<vmem>>, %arg8: memref<64x32xf32, #tpu.memory_space<vmem>>, %arg9: memref<1x32xf32, #tpu.memory_space<vmem>>, %arg10: memref<32x128xf32, #tpu.memory_space<vmem>>, %arg11: memref<1x128xf32, #tpu.memory_space<vmem>>, %arg12: memref<256x128xf32, #tpu.memory_space<vmem>>) attributes {dimension_semantics = [#tpu.dimension_semantics<parallel>], iteration_bounds = array<i64: 2>, scalar_prefetch = 0 : i64, scratch_operands = 0 : i64, tpu.core_type = #tpu.core_type<tc>, window_params = [{transform_indices = @transform_0, window_bounds = array<i64: 256, 32>}, {transform_indices = @transform_1, window_bounds = array<i64: 256, 16>}, {transform_indices = @transform_2, window_bounds = array<i64: 256, 16>}, {pipeline_mode = #tpu.pipeline_mode<synchronous>, transform_indices = @transform_3, window_bounds = array<i64: 32, 64>}, {pipeline_mode = #tpu.pipeline_mode<synchronous>, transform_indices = @transform_4, window_bounds = array<i64: 16, 64>}, {pipeline_mode = #tpu.pipeline_mode<synchronous>, transform_indices = @transform_5, window_bounds = array<i64: 16, 64>}, {pipeline_mode = #tpu.pipeline_mode<synchronous>, transform_indices = @transform_6, window_bounds = array<i64: 1, 64>}, {pipeline_mode = #tpu.pipeline_mode<synchronous>, transform_indices = @transform_7, window_bounds = array<i64: 64, 32>}, {pipeline_mode = #tpu.pipeline_mode<synchronous>, transform_indices = @transform_8, window_bounds = array<i64: 1, 32>}, {pipeline_mode = #tpu.pipeline_mode<synchronous>, transform_indices = @transform_9, window_bounds = array<i64: 32, 128>}, {pipeline_mode = #tpu.pipeline_mode<synchronous>, transform_indices = @transform_10, window_bounds = array<i64: 1, 128>}, {transform_indices = @transform_11, window_bounds = array<i64: 256, 128>}]} {
    %c0 = arith.constant 0 : index
    %c0_0 = arith.constant 0 : index
    %0 = vector.load %arg1[%c0, %c0_0] : memref<256x32xf32, #tpu.memory_space<vmem>>, vector<256x32xf32>
    %c0_1 = arith.constant 0 : index
    %c0_2 = arith.constant 0 : index
    %1 = vector.load %arg4[%c0_1, %c0_2] : memref<32x64xf32, #tpu.memory_space<vmem>>, vector<32x64xf32>
    %cst = arith.constant dense<0.000000e+00> : vector<256x64xf32>
    %2 = tpu.matmul %0, %1, %cst {dimension_numbers = #tpu.dot_dimension_numbers<[1], [0], [0], [1], [0, 0, 1, 1], [], []>} : vector<256x32xf32>, vector<32x64xf32>, vector<256x64xf32> -> vector<256x64xf32>
    %c0_3 = arith.constant 0 : index
    %c0_4 = arith.constant 0 : index
    %3 = vector.load %arg2[%c0_3, %c0_4] : memref<256x16xf32, #tpu.memory_space<vmem>>, vector<256x16xf32>
    %c0_5 = arith.constant 0 : index
    %c0_6 = arith.constant 0 : index
    %4 = vector.load %arg5[%c0_5, %c0_6] : memref<16x64xf32, #tpu.memory_space<vmem>>, vector<16x64xf32>
    %cst_7 = arith.constant dense<0.000000e+00> : vector<256x64xf32>
    %5 = tpu.matmul %3, %4, %cst_7 {dimension_numbers = #tpu.dot_dimension_numbers<[1], [0], [0], [1], [0, 0, 1, 1], [], []>} : vector<256x16xf32>, vector<16x64xf32>, vector<256x64xf32> -> vector<256x64xf32>
    %6 = arith.addf %2, %5 : vector<256x64xf32>
    %c0_8 = arith.constant 0 : index
    %c0_9 = arith.constant 0 : index
    %7 = vector.load %arg3[%c0_8, %c0_9] : memref<256x16xf32, #tpu.memory_space<vmem>>, vector<256x16xf32>
    %c0_10 = arith.constant 0 : index
    %c0_11 = arith.constant 0 : index
    %8 = vector.load %arg6[%c0_10, %c0_11] : memref<16x64xf32, #tpu.memory_space<vmem>>, vector<16x64xf32>
    %cst_12 = arith.constant dense<0.000000e+00> : vector<256x64xf32>
    %9 = tpu.matmul %7, %8, %cst_12 {dimension_numbers = #tpu.dot_dimension_numbers<[1], [0], [0], [1], [0, 0, 1, 1], [], []>} : vector<256x16xf32>, vector<16x64xf32>, vector<256x64xf32> -> vector<256x64xf32>
    %10 = arith.addf %6, %9 : vector<256x64xf32>
    %c0_13 = arith.constant 0 : index
    %c0_14 = arith.constant 0 : index
    %11 = vector.load %arg7[%c0_13, %c0_14] : memref<1x64xf32, #tpu.memory_space<vmem>>, vector<1x64xf32>
    %12 = vector.broadcast %11 : vector<1x64xf32> to vector<256x64xf32>
    %13 = arith.addf %10, %12 : vector<256x64xf32>
    %cst_15 = arith.constant 0.000000e+00 : f32
    %14 = vector.broadcast %cst_15 : f32 to vector<256x64xf32>
    %15 = arith.maximumf %13, %14 : vector<256x64xf32>
    %c0_16 = arith.constant 0 : index
    %c0_17 = arith.constant 0 : index
    %16 = vector.load %arg8[%c0_16, %c0_17] : memref<64x32xf32, #tpu.memory_space<vmem>>, vector<64x32xf32>
    %cst_18 = arith.constant dense<0.000000e+00> : vector<256x32xf32>
    %17 = tpu.matmul %15, %16, %cst_18 {dimension_numbers = #tpu.dot_dimension_numbers<[1], [0], [0], [1], [0, 0, 1, 1], [], []>} : vector<256x64xf32>, vector<64x32xf32>, vector<256x32xf32> -> vector<256x32xf32>
    %c0_19 = arith.constant 0 : index
    %c0_20 = arith.constant 0 : index
    %18 = vector.load %arg9[%c0_19, %c0_20] : memref<1x32xf32, #tpu.memory_space<vmem>>, vector<1x32xf32>
    %19 = vector.broadcast %18 : vector<1x32xf32> to vector<256x32xf32>
    %20 = arith.addf %17, %19 : vector<256x32xf32>
    %cst_21 = arith.constant 0.000000e+00 : f32
    %21 = vector.broadcast %cst_21 : f32 to vector<256x32xf32>
    %22 = arith.maximumf %20, %21 : vector<256x32xf32>
    %c0_22 = arith.constant 0 : index
    %c0_23 = arith.constant 0 : index
    %23 = vector.load %arg10[%c0_22, %c0_23] : memref<32x128xf32, #tpu.memory_space<vmem>>, vector<32x128xf32>
    %cst_24 = arith.constant dense<0.000000e+00> : vector<256x128xf32>
    %24 = tpu.matmul %22, %23, %cst_24 {dimension_numbers = #tpu.dot_dimension_numbers<[1], [0], [0], [1], [0, 0, 1, 1], [], []>} : vector<256x32xf32>, vector<32x128xf32>, vector<256x128xf32> -> vector<256x128xf32>
    %c0_25 = arith.constant 0 : index
    %c0_26 = arith.constant 0 : index
    %25 = vector.load %arg11[%c0_25, %c0_26] : memref<1x128xf32, #tpu.memory_space<vmem>>, vector<1x128xf32>
    %26 = vector.broadcast %25 : vector<1x128xf32> to vector<256x128xf32>
    %27 = arith.addf %24, %26 : vector<256x128xf32>
    %28 = arith.mulf %27, %27 : vector<256x128xf32>
    %cst_27 = arith.constant dense<0.000000e+00> : vector<256xf32>
    %29 = vector.multi_reduction <add>, %28, %cst_27 [1] : vector<256x128xf32> to vector<256xf32>
    %30 = vector.shape_cast %29 : vector<256xf32> to vector<256x1xf32>
    %cst_28 = arith.constant 1.000000e-24 : f32
    %31 = vector.broadcast %cst_28 : f32 to vector<256x1xf32>
    %32 = arith.maximumf %30, %31 : vector<256x1xf32>
    %33 = math.rsqrt %32 : vector<256x1xf32>
    %34 = vector.broadcast %33 : vector<256x1xf32> to vector<256x128xf32>
    %35 = arith.mulf %27, %34 : vector<256x128xf32>
    %c0_29 = arith.constant 0 : index
    %c0_30 = arith.constant 0 : index
    %36 = vector.load %arg12[%c0_29, %c0_30] : memref<256x128xf32, #tpu.memory_space<vmem>>, vector<256x128xf32>
    tpu.vector_store %arg12[%c0_29, %c0_30], %35 {strides = array<i32>} : memref<256x128xf32, #tpu.memory_space<vmem>>, vector<256x128xf32>,
    return
  }
  func.func @transform_0(%arg0: i32) -> (i32, i32) {
    %c0_i32 = arith.constant 0 : i32
    %c0_i32_0 = arith.constant 0 : i32
    return %arg0, %c0_i32 : i32, i32
  }
  func.func @transform_1(%arg0: i32) -> (i32, i32) {
    %c0_i32 = arith.constant 0 : i32
    %c0_i32_0 = arith.constant 0 : i32
    return %arg0, %c0_i32 : i32, i32
  }
  func.func @transform_2(%arg0: i32) -> (i32, i32) {
    %c0_i32 = arith.constant 0 : i32
    %c0_i32_0 = arith.constant 0 : i32
    return %arg0, %c0_i32 : i32, i32
  }
  func.func @transform_3(%arg0: i32) -> (i32, i32) {
    %c0_i32 = arith.constant 0 : i32
    %c0_i32_0 = arith.constant 0 : i32
    %c0_i32_1 = arith.constant 0 : i32
    return %c0_i32, %c0_i32_0 : i32, i32
  }
  func.func @transform_4(%arg0: i32) -> (i32, i32) {
    %c0_i32 = arith.constant 0 : i32
    %c0_i32_0 = arith.constant 0 : i32
    %c0_i32_1 = arith.constant 0 : i32
    return %c0_i32, %c0_i32_0 : i32, i32
  }
  func.func @transform_5(%arg0: i32) -> (i32, i32) {
    %c0_i32 = arith.constant 0 : i32
    %c0_i32_0 = arith.constant 0 : i32
    %c0_i32_1 = arith.constant 0 : i32
    return %c0_i32, %c0_i32_0 : i32, i32
  }
  func.func @transform_6(%arg0: i32) -> (i32, i32) {
    %c0_i32 = arith.constant 0 : i32
    %c0_i32_0 = arith.constant 0 : i32
    %c0_i32_1 = arith.constant 0 : i32
    return %c0_i32, %c0_i32_0 : i32, i32
  }
  func.func @transform_7(%arg0: i32) -> (i32, i32) {
    %c0_i32 = arith.constant 0 : i32
    %c0_i32_0 = arith.constant 0 : i32
    %c0_i32_1 = arith.constant 0 : i32
    return %c0_i32, %c0_i32_0 : i32, i32
  }
  func.func @transform_8(%arg0: i32) -> (i32, i32) {
    %c0_i32 = arith.constant 0 : i32
    %c0_i32_0 = arith.constant 0 : i32
    %c0_i32_1 = arith.constant 0 : i32
    return %c0_i32, %c0_i32_0 : i32, i32
  }
  func.func @transform_9(%arg0: i32) -> (i32, i32) {
    %c0_i32 = arith.constant 0 : i32
    %c0_i32_0 = arith.constant 0 : i32
    %c0_i32_1 = arith.constant 0 : i32
    return %c0_i32, %c0_i32_0 : i32, i32
  }
  func.func @transform_10(%arg0: i32) -> (i32, i32) {
    %c0_i32 = arith.constant 0 : i32
    %c0_i32_0 = arith.constant 0 : i32
    %c0_i32_1 = arith.constant 0 : i32
    return %c0_i32, %c0_i32_0 : i32, i32
  }
  func.func @transform_11(%arg0: i32) -> (i32, i32) {
    %c0_i32 = arith.constant 0 : i32
    %c0_i32_0 = arith.constant 0 : i32
    return %arg0, %c0_i32 : i32, i32
  }
}

</mosaic_0001>

<llo_original>
// kernel: tpu_custom_call.1
$region0: #{tpu_custom_call.1}
  #allocation0 [shape = 'u32[]', space=smem, size = 0x4, offset = 0x4, fixed_abs, tag = 'smem constant byte address 0x4 - core index']
  #allocation1 [shape = 'u32[144,128]{1,0:T(1,128)}', space=vmem, size = 0x12000, scoped, tag = 'internal scratch']
  %s0 = inlined_call_operand.vmem [shape: f32[512,32], index: 0, kind: input, shape index: {}]
  %s1 = inlined_call_operand.vmem [shape: f32[512,16], index: 1, kind: input, shape index: {}]
  %s2 = inlined_call_operand.vmem [shape: f32[512,16], index: 2, kind: input, shape index: {}]
  %s3 = inlined_call_operand.vmem [shape: f32[32,64], index: 3, kind: input, shape index: {}]
  %s4 = inlined_call_operand.vmem [shape: f32[16,64], index: 4, kind: input, shape index: {}]
  %s5 = inlined_call_operand.vmem [shape: f32[16,64], index: 5, kind: input, shape index: {}]
  %s6 = inlined_call_operand.vmem [shape: f32[1,64], index: 6, kind: input, shape index: {}]
  %s7 = inlined_call_operand.vmem [shape: f32[64,32], index: 7, kind: input, shape index: {}]
  %s8 = inlined_call_operand.vmem [shape: f32[1,32], index: 8, kind: input, shape index: {}]
  %s9 = inlined_call_operand.vmem [shape: f32[32,128], index: 9, kind: input, shape index: {}]
  %s10 = inlined_call_operand.vmem [shape: f32[1,128], index: 10, kind: input, shape index: {}]
  %s11 = inlined_call_operand.hbm [shape: f32[512,128], index: 11, kind: output, shape index: {}]
  %s12 = sld [smem:[#allocation0]]
  $region77: #{tpu_custom_call.1} parent=0
    _
  %s14 = ssub.s32 1, %s12
  %s15 = scalar_select 0, %s14, %s12
  $region1: #{tpu_custom_call.1} parent=0
    #allocation2 [shape = 'u8[262144]{0}', space=vmem, size = 0x40000, scoped, tag = 'output window, operand 0']
    #allocation3 [shape = 's32[2]{0}', space=sflag, size = 0x8, scoped, tag = 'scoped memory for tpu_custom_call.1']
    %16 = vsyncpa [#allocation3], 0
    %s17 = scalar_lea.sflag [#allocation3], 1
    %18 = vsyncpa %s17, 0
    loop: start=0, step=1, limit=4
    $region2: #{tpu_custom_call.1} parent=1 // loop_pre_header
      _
    $region3: #{tpu_custom_call.1} parent=1 // loop_header
      %s20 = sphi 0, %s24
      %p21 = scmp.ge.s32.totalorder %s20, 4
      %s30 = sphi 0, %s32
      %s33 = sphi 0, %s30
      %s34 = sphi 0, %s33
      %s50 = sphi 0, %s34
      %s56 = sphi 0, %s58
      %s59 = sphi 0, %s56
      %s60 = sphi 0, %s59
      %s76 = sphi 0, %s60
      %s82 = sphi 0, %s84
      %s85 = sphi 0, %s82
      %s86 = sphi 0, %s85
      %s102 = sphi 0, %s86
      %s106 = sphi 0, %s106
      %s108 = sphi 0, %s106
      %s109 = sphi 0, %s108
      %s123 = sphi 0, %s109
      %s127 = sphi 0, %s127
      %s129 = sphi 0, %s127
      %s130 = sphi 0, %s129
      %s144 = sphi 0, %s130
      %s148 = sphi 0, %s148
      %s150 = sphi 0, %s148
      %s151 = sphi 0, %s150
      %s165 = sphi 0, %s151
      %s169 = sphi 0, %s169
      %s171 = sphi 0, %s169
      %s172 = sphi 0, %s171
      %s186 = sphi 0, %s172
      %s190 = sphi 0, %s190
      %s192 = sphi 0, %s190
      %s193 = sphi 0, %s192
      %s207 = sphi 0, %s193
      %s211 = sphi 0, %s211
      %s213 = sphi 0, %s211
      %s214 = sphi 0, %s213
      %s228 = sphi 0, %s214
      %s232 = sphi 0, %s232
      %s234 = sphi 0, %s232
      %s235 = sphi 0, %s234
      %s249 = sphi 0, %s235
      %s253 = sphi 0, %s253
      %s255 = sphi 0, %s253
      %s256 = sphi 0, %s255
      %s270 = sphi 0, %s256
      %s276 = sphi 0, %s278
      %s279 = sphi 0, %s276
      %s280 = sphi 0, %s279
      %s296 = sphi 0, %s280
    $region4: #{tpu_custom_call.1} parent=1 // loop_header_branch
      %23 = sbr.rel (%p21) target = $region8
    $region5: #{tpu_custom_call.1} parent=1 // loop_body
      %s25 = ssub.s32 %s20, 1
      %s26 = ssub.s32 %s20, 2
      %s27 = sadd.s32 %s20, 1
      %s28 = ssub.s32 %s20, %s27
      %p29 = scmp.eq.s32.totalorder %s28, 0
      %s31 = sadd.s32 %s30, 1
      %s32 = scalar_select %p29, %s30, %s31
      %p35 = pneg %p29
      %p36 = scmp.eq.s32.totalorder %s20, 1
      %p37 = por %p35, %p36
      %p38 = scmp.ne.s32.totalorder %s30, %s33
      %p39 = scmp.eq.s32.totalorder %s20, 0
      %p40 = por %p38, %p39
      %p41 = scmp.ne.s32.totalorder %s30, %s33
      %p42 = scmp.eq.s32.totalorder %s25, 1
      %p43 = por %p41, %p42
      %p44 = scmp.ne.s32.totalorder %s33, %s34
      %p45 = scmp.eq.s32.totalorder %s25, 0
      %p46 = por %p44, %p45
      %p47 = scmp.ne.s32.totalorder %s33, %s34
      %p48 = scmp.eq.s32.totalorder %s26, 1
      %p49 = por %p47, %p48
      %p51 = scmp.ne.s32.totalorder %s34, %s50
      %p52 = scmp.eq.s32.totalorder %s26, 0
      %p53 = por %p51, %p52
      %s54 = ssub.s32 %s20, %s27
      %p55 = scmp.eq.s32.totalorder %s54, 0
      %s57 = sadd.s32 %s56, 1
      %s58 = scalar_select %p55, %s56, %s57
      %p61 = pneg %p55
      %p62 = scmp.eq.s32.totalorder %s20, 1
      %p63 = por %p61, %p62
      %p64 = scmp.ne.s32.totalorder %s56, %s59
      %p65 = scmp.eq.s32.totalorder %s20, 0
      %p66 = por %p64, %p65
      %p67 = scmp.ne.s32.totalorder %s56, %s59
      %p68 = scmp.eq.s32.totalorder %s25, 1
      %p69 = por %p67, %p68
      %p70 = scmp.ne.s32.totalorder %s59, %s60
      %p71 = scmp.eq.s32.totalorder %s25, 0
      %p72 = por %p70, %p71
      %p73 = scmp.ne.s32.totalorder %s59, %s60
      %p74 = scmp.eq.s32.totalorder %s26, 1
      %p75 = por %p73, %p74
      %p77 = scmp.ne.s32.totalorder %s60, %s76
      %p78 = scmp.eq.s32.totalorder %s26, 0
      %p79 = por %p77, %p78
      %s80 = ssub.s32 %s20, %s27
      %p81 = scmp.eq.s32.totalorder %s80, 0
      %s83 = sadd.s32 %s82, 1
      %s84 = scalar_select %p81, %s82, %s83
      %p87 = pneg %p81
      %p88 = scmp.eq.s32.totalorder %s20, 1
      %p89 = por %p87, %p88
      %p90 = scmp.ne.s32.totalorder %s82, %s85
      %p91 = scmp.eq.s32.totalorder %s20, 0
      %p92 = por %p90, %p91
      %p93 = scmp.ne.s32.totalorder %s82, %s85
      %p94 = scmp.eq.s32.totalorder %s25, 1
      %p95 = por %p93, %p94
      %p96 = scmp.ne.s32.totalorder %s85, %s86
      %p97 = scmp.eq.s32.totalorder %s25, 0
      %p98 = por %p96, %p97
      %p99 = scmp.ne.s32.totalorder %s85, %s86
      %p100 = scmp.eq.s32.totalorder %s26, 1
      %p101 = por %p99, %p100
      %p103 = scmp.ne.s32.totalorder %s86, %s102
      %p104 = scmp.eq.s32.totalorder %s26, 0
      %p105 = por %p103, %p104
      %s107 = sadd.s32 %s106, 1
      %p110 = scmp.eq.s32.totalorder %s20, 1
      %p111 = scmp.ne.s32.totalorder %s106, %s108
      %p112 = scmp.eq.s32.totalorder %s20, 0
      %p113 = por %p111, %p112
      %p114 = scmp.ne.s32.totalorder %s106, %s108
      %p115 = scmp.eq.s32.totalorder %s25, 1
      %p116 = por %p114, %p115
      %p117 = scmp.ne.s32.totalorder %s108, %s109
      %p118 = scmp.eq.s32.totalorder %s25, 0
      %p119 = por %p117, %p118
      %p120 = scmp.ne.s32.totalorder %s108, %s109
      %p121 = scmp.eq.s32.totalorder %s26, 1
      %p122 = por %p120, %p121
      %p124 = scmp.ne.s32.totalorder %s109, %s123
      %p125 = scmp.eq.s32.totalorder %s26, 0
      %p126 = por %p124, %p125
      %s128 = sadd.s32 %s127, 1
      %p131 = scmp.eq.s32.totalorder %s20, 1
      %p132 = scmp.ne.s32.totalorder %s127, %s129
      %p133 = scmp.eq.s32.totalorder %s20, 0
      %p134 = por %p132, %p133
      %p135 = scmp.ne.s32.totalorder %s127, %s129
      %p136 = scmp.eq.s32.totalorder %s25, 1
      %p137 = por %p135, %p136
      %p138 = scmp.ne.s32.totalorder %s129, %s130
      %p139 = scmp.eq.s32.totalorder %s25, 0
      %p140 = por %p138, %p139
      %p141 = scmp.ne.s32.totalorder %s129, %s130
      %p142 = scmp.eq.s32.totalorder %s26, 1
      %p143 = por %p141, %p142
      %p145 = scmp.ne.s32.totalorder %s130, %s144
      %p146 = scmp.eq.s32.totalorder %s26, 0
      %p147 = por %p145, %p146
      %s149 = sadd.s32 %s148, 1
      %p152 = scmp.eq.s32.totalorder %s20, 1
      %p153 = scmp.ne.s32.totalorder %s148, %s150
      %p154 = scmp.eq.s32.totalorder %s20, 0
      %p155 = por %p153, %p154
      %p156 = scmp.ne.s32.totalorder %s148, %s150
      %p157 = scmp.eq.s32.totalorder %s25, 1
      %p158 = por %p156, %p157
      %p159 = scmp.ne.s32.totalorder %s150, %s151
      %p160 = scmp.eq.s32.totalorder %s25, 0
      %p161 = por %p159, %p160
      %p162 = scmp.ne.s32.totalorder %s150, %s151
      %p163 = scmp.eq.s32.totalorder %s26, 1
      %p164 = por %p162, %p163
      %p166 = scmp.ne.s32.totalorder %s151, %s165
      %p167 = scmp.eq.s32.totalorder %s26, 0
      %p168 = por %p166, %p167
      %s170 = sadd.s32 %s169, 1
      %p173 = scmp.eq.s32.totalorder %s20, 1
      %p174 = scmp.ne.s32.totalorder %s169, %s171
      %p175 = scmp.eq.s32.totalorder %s20, 0
      %p176 = por %p174, %p175
      %p177 = scmp.ne.s32.totalorder %s169, %s171
      %p178 = scmp.eq.s32.totalorder %s25, 1
      %p179 = por %p177, %p178
      %p180 = scmp.ne.s32.totalorder %s171, %s172
      %p181 = scmp.eq.s32.totalorder %s25, 0
      %p182 = por %p180, %p181
      %p183 = scmp.ne.s32.totalorder %s171, %s172
      %p184 = scmp.eq.s32.totalorder %s26, 1
      %p185 = por %p183, %p184
      %p187 = scmp.ne.s32.totalorder %s172, %s186
      %p188 = scmp.eq.s32.totalorder %s26, 0
      %p189 = por %p187, %p188
      %s191 = sadd.s32 %s190, 1
      %p194 = scmp.eq.s32.totalorder %s20, 1
      %p195 = scmp.ne.s32.totalorder %s190, %s192
      %p196 = scmp.eq.s32.totalorder %s20, 0
      %p197 = por %p195, %p196
      %p198 = scmp.ne.s32.totalorder %s190, %s192
      %p199 = scmp.eq.s32.totalorder %s25, 1
      %p200 = por %p198, %p199
      %p201 = scmp.ne.s32.totalorder %s192, %s193
      %p202 = scmp.eq.s32.totalorder %s25, 0
      %p203 = por %p201, %p202
      %p204 = scmp.ne.s32.totalorder %s192, %s193
      %p205 = scmp.eq.s32.totalorder %s26, 1
      %p206 = por %p204, %p205
      %p208 = scmp.ne.s32.totalorder %s193, %s207
      %p209 = scmp.eq.s32.totalorder %s26, 0
      %p210 = por %p208, %p209
      %s212 = sadd.s32 %s211, 1
      %p215 = scmp.eq.s32.totalorder %s20, 1
      %p216 = scmp.ne.s32.totalorder %s211, %s213
      %p217 = scmp.eq.s32.totalorder %s20, 0
      %p218 = por %p216, %p217
      %p219 = scmp.ne.s32.totalorder %s211, %s213
      %p220 = scmp.eq.s32.totalorder %s25, 1
      %p221 = por %p219, %p220
      %p222 = scmp.ne.s32.totalorder %s213, %s214
      %p223 = scmp.eq.s32.totalorder %s25, 0
      %p224 = por %p222, %p223
      %p225 = scmp.ne.s32.totalorder %s213, %s214
      %p226 = scmp.eq.s32.totalorder %s26, 1
      %p227 = por %p225, %p226
      %p229 = scmp.ne.s32.totalorder %s214, %s228
      %p230 = scmp.eq.s32.totalorder %s26, 0
      %p231 = por %p229, %p230
      %s233 = sadd.s32 %s232, 1
      %p236 = scmp.eq.s32.totalorder %s20, 1
      %p237 = scmp.ne.s32.totalorder %s232, %s234
      %p238 = scmp.eq.s32.totalorder %s20, 0
      %p239 = por %p237, %p238
      %p240 = scmp.ne.s32.totalorder %s232, %s234
      %p241 = scmp.eq.s32.totalorder %s25, 1
      %p242 = por %p240, %p241
      %p243 = scmp.ne.s32.totalorder %s234, %s235
      %p244 = scmp.eq.s32.totalorder %s25, 0
      %p245 = por %p243, %p244
      %p246 = scmp.ne.s32.totalorder %s234, %s235
      %p247 = scmp.eq.s32.totalorder %s26, 1
      %p248 = por %p246, %p247
      %p250 = scmp.ne.s32.totalorder %s235, %s249
      %p251 = scmp.eq.s32.totalorder %s26, 0
      %p252 = por %p250, %p251
      %s254 = sadd.s32 %s253, 1
      %p257 = scmp.eq.s32.totalorder %s20, 1
      %p258 = scmp.ne.s32.totalorder %s253, %s255
      %p259 = scmp.eq.s32.totalorder %s20, 0
      %p260 = por %p258, %p259
      %p261 = scmp.ne.s32.totalorder %s253, %s255
      %p262 = scmp.eq.s32.totalorder %s25, 1
      %p263 = por %p261, %p262
      %p264 = scmp.ne.s32.totalorder %s255, %s256
      %p265 = scmp.eq.s32.totalorder %s25, 0
      %p266 = por %p264, %p265
      %p267 = scmp.ne.s32.totalorder %s255, %s256
      %p268 = scmp.eq.s32.totalorder %s26, 1
      %p269 = por %p267, %p268
      %p271 = scmp.ne.s32.totalorder %s256, %s270
      %p272 = scmp.eq.s32.totalorder %s26, 0
      %p273 = por %p271, %p272
      %s274 = ssub.s32 %s20, %s27
      %p275 = scmp.eq.s32.totalorder %s274, 0
      %s277 = sadd.s32 %s276, 1
      %s278 = scalar_select %p275, %s276, %s277
      %p281 = pneg %p275
      %p282 = scmp.eq.s32.totalorder %s20, 1
      %p283 = por %p281, %p282
      %p284 = scmp.ne.s32.totalorder %s276, %s279
      %p285 = scmp.eq.s32.totalorder %s20, 0
      %p286 = por %p284, %p285
      %p287 = scmp.ne.s32.totalorder %s276, %s279
      %p288 = scmp.eq.s32.totalorder %s25, 1
      %p289 = por %p287, %p288
      %p290 = scmp.ne.s32.totalorder %s279, %s280
      %p291 = scmp.eq.s32.totalorder %s25, 0
      %p292 = por %p290, %p291
      %p293 = scmp.ne.s32.totalorder %s279, %s280
      %p294 = scmp.eq.s32.totalorder %s26, 1
      %p295 = por %p293, %p294
      %p297 = scmp.ne.s32.totalorder %s280, %s296
      %p298 = scmp.eq.s32.totalorder %s26, 0
      %p299 = por %p297, %p298
      %p300 = scmp.le.s32.totalorder 1, %s20
      %p301 = scmp.lt.s32.totalorder %s20, 3
      %p302 = pnand %p300, %p301
      %p303 = pneg %p302
      // Predicated region
      $region9: #{tpu_custom_call.1} parent=5 // pred_check
        _
      $region10: #{tpu_custom_call.1} parent=5 // pred_check_branch
        %305 = sbr.rel (%p302) target = $region12
      $region11: #{tpu_custom_call.1} parent=5 // pred_region
        %s306 = ssub.s32 %s20, 1
        // Predicated region
        $region13: #{tpu_custom_call.1} parent=11 // pred_check
          %p307 = pneg %p119
        $region14: #{tpu_custom_call.1} parent=11 // pred_check_branch
          %309 = sbr.rel (%p307) target = $region16
        $region15: #{tpu_custom_call.1} parent=11 // pred_region
          _
        $region16: #{tpu_custom_call.1} parent=11 // pred_fallthru
          _
        // Predicated region
        $region17: #{tpu_custom_call.1} parent=11 // pred_check
          %p310 = pneg %p140
        $region18: #{tpu_custom_call.1} parent=11 // pred_check_branch
          %312 = sbr.rel (%p310) target = $region20
        $region19: #{tpu_custom_call.1} parent=11 // pred_region
          _
        $region20: #{tpu_custom_call.1} parent=11 // pred_fallthru
          _
        // Predicated region
        $region21: #{tpu_custom_call.1} parent=11 // pred_check
          %p313 = pneg %p161
        $region22: #{tpu_custom_call.1} parent=11 // pred_check_branch
          %315 = sbr.rel (%p313) target = $region24
        $region23: #{tpu_custom_call.1} parent=11 // pred_region
          _
        $region24: #{tpu_custom_call.1} parent=11 // pred_fallthru
          _
        // Predicated region
        $region25: #{tpu_custom_call.1} parent=11 // pred_check
          %p316 = pneg %p182
        $region26: #{tpu_custom_call.1} parent=11 // pred_check_branch
          %318 = sbr.rel (%p316) target = $region28
        $region27: #{tpu_custom_call.1} parent=11 // pred_region
          _
        $region28: #{tpu_custom_call.1} parent=11 // pred_fallthru
          _
        // Predicated region
        $region29: #{tpu_custom_call.1} parent=11 // pred_check
          %p319 = pneg %p203
        $region30: #{tpu_custom_call.1} parent=11 // pred_check_branch
          %321 = sbr.rel (%p319) target = $region32
        $region31: #{tpu_custom_call.1} parent=11 // pred_region
          _
        $region32: #{tpu_custom_call.1} parent=11 // pred_fallthru
          _
        // Predicated region
        $region33: #{tpu_custom_call.1} parent=11 // pred_check
          %p322 = pneg %p224
        $region34: #{tpu_custom_call.1} parent=11 // pred_check_branch
          %324 = sbr.rel (%p322) target = $region36
        $region35: #{tpu_custom_call.1} parent=11 // pred_region
          _
        $region36: #{tpu_custom_call.1} parent=11 // pred_fallthru
          _
        // Predicated region
        $region37: #{tpu_custom_call.1} parent=11 // pred_check
          %p325 = pneg %p245
        $region38: #{tpu_custom_call.1} parent=11 // pred_check_branch
          %327 = sbr.rel (%p325) target = $region40
        $region39: #{tpu_custom_call.1} parent=11 // pred_region
          _
        $region40: #{tpu_custom_call.1} parent=11 // pred_fallthru
          _
        // Predicated region
        $region41: #{tpu_custom_call.1} parent=11 // pred_check
          %p328 = pneg %p266
        $region42: #{tpu_custom_call.1} parent=11 // pred_check_branch
          %330 = sbr.rel (%p328) target = $region44
        $region43: #{tpu_custom_call.1} parent=11 // pred_region
          _
        $region44: #{tpu_custom_call.1} parent=11 // pred_fallthru
          _
      $region12: #{tpu_custom_call.1} parent=5 // pred_fallthru
        _
      %p331 = scmp.lt.s32.totalorder %s20, 2
      // Predicated region
      $region45: #{tpu_custom_call.1} parent=5 // pred_check
        %p332 = pneg %p331
      $region46: #{tpu_custom_call.1} parent=5 // pred_check_branch
        %334 = sbr.rel (%p332) target = $region48
      $region47: #{tpu_custom_call.1} parent=5 // pred_region
        // Predicated region
        $region49: #{tpu_custom_call.1} parent=47 // pred_check
          %p335 = pneg %p40
        $region50: #{tpu_custom_call.1} parent=47 // pred_check_branch
          %337 = sbr.rel (%p335) target = $region52
        $region51: #{tpu_custom_call.1} parent=47 // pred_region
          %s338 = smul.u32 32, %s20
          %p339 = scmp.lt.s32.totalorder %s338, 63
          %s340 = scalar_select %p339, %s338, 63
          %s341 = smul.addr %s340, 8
          %s342 = scalar_lea.vmem %s0, %s341
          %s343 = smul.u32 32, %s20
        $region52: #{tpu_custom_call.1} parent=47 // pred_fallthru
          _
        // Predicated region
        $region53: #{tpu_custom_call.1} parent=47 // pred_check
          %p344 = pneg %p66
        $region54: #{tpu_custom_call.1} parent=47 // pred_check_branch
          %346 = sbr.rel (%p344) target = $region56
        $region55: #{tpu_custom_call.1} parent=47 // pred_region
          %s347 = smul.u32 32, %s20
          %p348 = scmp.lt.s32.totalorder %s347, 63
          %s349 = scalar_select %p348, %s347, 63
          %s350 = smul.addr %s349, 8
          %s351 = scalar_lea.vmem %s1, %s350
          %s352 = smul.u32 32, %s20
        $region56: #{tpu_custom_call.1} parent=47 // pred_fallthru
          _
        // Predicated region
        $region57: #{tpu_custom_call.1} parent=47 // pred_check
          %p353 = pneg %p92
        $region58: #{tpu_custom_call.1} parent=47 // pred_check_branch
          %355 = sbr.rel (%p353) target = $region60
        $region59: #{tpu_custom_call.1} parent=47 // pred_region
          %s356 = smul.u32 32, %s20
          %p357 = scmp.lt.s32.totalorder %s356, 63
          %s358 = scalar_select %p357, %s356, 63
          %s359 = smul.addr %s358, 8
          %s360 = scalar_lea.vmem %s2, %s359
          %s361 = smul.u32 32, %s20
        $region60: #{tpu_custom_call.1} parent=47 // pred_fallthru
          _
      $region48: #{tpu_custom_call.1} parent=5 // pred_fallthru
        _
      %p362 = scmp.le.s32.totalorder 1, %s20
      %p363 = scmp.lt.s32.totalorder %s20, 3
      %p364 = pnand %p362, %p363
      %p365 = pneg %p364
      // Predicated region
      $region61: #{tpu_custom_call.1} parent=5 // pred_check
        _
      $region62: #{tpu_custom_call.1} parent=5 // pred_check_branch
        %367 = sbr.rel (%p364) target = $region64
      $region63: #{tpu_custom_call.1} parent=5 // pred_region
        %s368 = ssub.s32 %s20, 1
        %s369 = smul.u32 32, %s25
        %p370 = scmp.lt.s32.totalorder %s369, 63
        %s371 = scalar_select %p370, %s369, 63
        %s372 = smul.addr %s371, 8
        %s373 = scalar_lea.vmem %s0, %s372
        %p374 = pneg %p46
        %p375 = pneg %p43
        %s376 = smul.u32 32, %s25
        %p377 = scmp.lt.s32.totalorder %s376, 63
        %s378 = scalar_select %p377, %s376, 63
        %s379 = smul.addr %s378, 8
        %s380 = scalar_lea.vmem %s1, %s379
        %p381 = pneg %p72
        %p382 = pneg %p69
        %s383 = smul.u32 32, %s25
        %p384 = scmp.lt.s32.totalorder %s383, 63
        %s385 = scalar_select %p384, %s383, 63
        %s386 = smul.addr %s385, 8
        %s387 = scalar_lea.vmem %s2, %s386
        %p388 = pneg %p98
        %p389 = pneg %p95
        %p390 = pneg %p119
        %p391 = pneg %p116
        %p392 = pneg %p140
        %p393 = pneg %p137
        %p394 = pneg %p161
        %p395 = pneg %p158
        %p396 = pneg %p182
        %p397 = pneg %p179
        %p398 = pneg %p203
        %p399 = pneg %p200
        %p400 = pneg %p224
        %p401 = pneg %p221
        %p402 = pneg %p245
        %p403 = pneg %p242
        %p404 = pneg %p266
        %p405 = pneg %p263
        %p406 = pneg %p292
        %p407 = pneg %p289
        %s408 = sand.u32 %s279, 1
        %s409 = scalar_lea.sflag [#allocation3], %s408
        %s410 = sand.u32 %s279, 1
        %s411 = smul.addr %s410, 256
        %s412 = scalar_lea.vmem [#allocation2], %s411
        %s413 = smul.u32 32, %s25
        %p414 = scmp.lt.s32.totalorder %s413, 63
        %s415 = scalar_select %p414, %s413, 63
        %s416 = smul.addr %s415, 8
        %s417 = scalar_lea.vmem %s0, %s416
        %s418 = smul.u32 32, %s25
        %s419 = smul.u32 32, %s25
        %p420 = scmp.lt.s32.totalorder %s419, 63
        %s421 = scalar_select %p420, %s419, 63
        %s422 = smul.addr %s421, 8
        %s423 = scalar_lea.vmem %s1, %s422
        %s424 = smul.u32 32, %s25
        %s425 = smul.u32 32, %s25
        %p426 = scmp.lt.s32.totalorder %s425, 63
        %s427 = scalar_select %p426, %s425, 63
        %s428 = smul.addr %s427, 8
        %s429 = scalar_lea.vmem %s2, %s428
        %s430 = smul.u32 32, %s25
        %s431 = smul.u32 32, %s25
        %v432 = vld [vmem:[%s417] sm:$0xff]
        %v433 = vld [vmem:[%s417 + $0x8] sm:$0xff]
        %v434 = vld [vmem:[%s417 + $0x10] sm:$0xff]
        %v435 = vld [vmem:[%s417 + $0x18] sm:$0xff]
        %v436 = vld [vmem:[%s417 + $0x20] sm:$0xff]
        %v437 = vld [vmem:[%s417 + $0x28] sm:$0xff]
        %v438 = vld [vmem:[%s417 + $0x30] sm:$0xff]
        %v439 = vld [vmem:[%s417 + $0x38] sm:$0xff]
        %v440 = vld [vmem:[%s417 + $0x40] sm:$0xff]
        %v441 = vld [vmem:[%s417 + $0x48] sm:$0xff]
        %v442 = vld [vmem:[%s417 + $0x50] sm:$0xff]
        %v443 = vld [vmem:[%s417 + $0x58] sm:$0xff]
        %v444 = vld [vmem:[%s417 + $0x60] sm:$0xff]
        %v445 = vld [vmem:[%s417 + $0x68] sm:$0xff]
        %v446 = vld [vmem:[%s417 + $0x70] sm:$0xff]
        %v447 = vld [vmem:[%s417 + $0x78] sm:$0xff]
        %v448 = vld [vmem:[%s417 + $0x80] sm:$0xff]
        %v449 = vld [vmem:[%s417 + $0x88] sm:$0xff]
        %v450 = vld [vmem:[%s417 + $0x90] sm:$0xff]
        %v451 = vld [vmem:[%s417 + $0x98] sm:$0xff]
        %v452 = vld [vmem:[%s417 + $0xa0] sm:$0xff]
        %v453 = vld [vmem:[%s417 + $0xa8] sm:$0xff]
        %v454 = vld [vmem:[%s417 + $0xb0] sm:$0xff]
        %v455 = vld [vmem:[%s417 + $0xb8] sm:$0xff]
        %v456 = vld [vmem:[%s417 + $0xc0] sm:$0xff]
        %v457 = vld [vmem:[%s417 + $0xc8] sm:$0xff]
        %v458 = vld [vmem:[%s417 + $0xd0] sm:$0xff]
        %v459 = vld [vmem:[%s417 + $0xd8] sm:$0xff]
        %v460 = vld [vmem:[%s417 + $0xe0] sm:$0xff]
        %v461 = vld [vmem:[%s417 + $0xe8] sm:$0xff]
        %v462 = vld [vmem:[%s417 + $0xf0] sm:$0xff]
        %v463 = vld [vmem:[%s417 + $0xf8] sm:$0xff]
        %v464 = vld [vmem:[%s3] sm:$0xff]
        %v465 = vld [vmem:[%s3 + $0x8] sm:$0xff]
        %v466 = vld [vmem:[%s3 + $0x10] sm:$0xff]
        %v467 = vld [vmem:[%s3 + $0x18] sm:$0xff]
        %v468 = vld [vmem:[%s423] sm:$0xff]
        %v469 = vld [vmem:[%s423 + $0x8] sm:$0xff]
        %v470 = vld [vmem:[%s423 + $0x10] sm:$0xff]
        %v471 = vld [vmem:[%s423 + $0x18] sm:$0xff]
        %v472 = vld [vmem:[%s423 + $0x20] sm:$0xff]
        %v473 = vld [vmem:[%s423 + $0x28] sm:$0xff]
        %v474 = vld [vmem:[%s423 + $0x30] sm:$0xff]
        %v475 = vld [vmem:[%s423 + $0x38] sm:$0xff]
        %v476 = vld [vmem:[%s423 + $0x40] sm:$0xff]
        %v477 = vld [vmem:[%s423 + $0x48] sm:$0xff]
        %v478 = vld [vmem:[%s423 + $0x50] sm:$0xff]
        %v479 = vld [vmem:[%s423 + $0x58] sm:$0xff]
        %v480 = vld [vmem:[%s423 + $0x60] sm:$0xff]
        %v481 = vld [vmem:[%s423 + $0x68] sm:$0xff]
        %v482 = vld [vmem:[%s423 + $0x70] sm:$0xff]
        %v483 = vld [vmem:[%s423 + $0x78] sm:$0xff]
        %v484 = vld [vmem:[%s423 + $0x80] sm:$0xff]
        %v485 = vld [vmem:[%s423 + $0x88] sm:$0xff]
        %v486 = vld [vmem:[%s423 + $0x90] sm:$0xff]
        %v487 = vld [vmem:[%s423 + $0x98] sm:$0xff]
        %v488 = vld [vmem:[%s423 + $0xa0] sm:$0xff]
        %v489 = vld [vmem:[%s423 + $0xa8] sm:$0xff]
        %v490 = vld [vmem:[%s423 + $0xb0] sm:$0xff]
        %v491 = vld [vmem:[%s423 + $0xb8] sm:$0xff]
        %v492 = vld [vmem:[%s423 + $0xc0] sm:$0xff]
        %v493 = vld [vmem:[%s423 + $0xc8] sm:$0xff]
        %v494 = vld [vmem:[%s423 + $0xd0] sm:$0xff]
        %v495 = vld [vmem:[%s423 + $0xd8] sm:$0xff]
        %v496 = vld [vmem:[%s423 + $0xe0] sm:$0xff]
        %v497 = vld [vmem:[%s423 + $0xe8] sm:$0xff]
        %v498 = vld [vmem:[%s423 + $0xf0] sm:$0xff]
        %v499 = vld [vmem:[%s423 + $0xf8] sm:$0xff]
        %v500 = vld [vmem:[%s4] sm:$0xff]
        %v501 = vld [vmem:[%s4 + $0x8] sm:$0xff]
        %vm502 = vcmask 130048
        %v504 = vsel %vm502, %v468, 0
        %v507 = vsel %vm502, %v469, 0
        %v510 = vsel %vm502, %v470, 0
        %v513 = vsel %vm502, %v471, 0
        %v516 = vsel %vm502, %v472, 0
        %v519 = vsel %vm502, %v473, 0
        %v522 = vsel %vm502, %v474, 0
        %v525 = vsel %vm502, %v475, 0
        %v528 = vsel %vm502, %v476, 0
        %v531 = vsel %vm502, %v477, 0
        %v534 = vsel %vm502, %v478, 0
        %v537 = vsel %vm502, %v479, 0
        %v540 = vsel %vm502, %v480, 0
        %v543 = vsel %vm502, %v481, 0
        %v546 = vsel %vm502, %v482, 0
        %v549 = vsel %vm502, %v483, 0
        %v552 = vsel %vm502, %v484, 0
        %v555 = vsel %vm502, %v485, 0
        %v558 = vsel %vm502, %v486, 0
        %v561 = vsel %vm502, %v487, 0
        %v564 = vsel %vm502, %v488, 0
        %v567 = vsel %vm502, %v489, 0
        %v570 = vsel %vm502, %v490, 0
        %v573 = vsel %vm502, %v491, 0
        %v576 = vsel %vm502, %v492, 0
        %v579 = vsel %vm502, %v493, 0
        %v582 = vsel %vm502, %v494, 0
        %v585 = vsel %vm502, %v495, 0
        %v588 = vsel %vm502, %v496, 0
        %v591 = vsel %vm502, %v497, 0
        %v594 = vsel %vm502, %v498, 0
        %v597 = vsel %vm502, %v499, 0
        %599 = vmatprep.subr.mxu0 0.0
        %600 = vmatpush1.msra.mxu0 0.0
        %601 = vmatprep.subr.mxu0 0.0
        %602 = vmatpush1.msra.mxu0 0.0
        %603 = vmatprep.subr.mxu0 0.0
        %604 = vmatpush1.msra.mxu0 0.0
        %605 = vmatprep.subr.mxu0 0.0
        %606 = vmatpush1.msra.mxu0 0.0
        %607 = vmatprep.subr.mxu0 0.0
        %608 = vmatpush1.msra.mxu0 0.0
        %609 = vmatprep.subr.mxu0 0.0
        %610 = vmatpush1.msra.mxu0 0.0
        %611 = vmatprep.subr.mxu0 0.0
        %612 = vmatpush1.msra.mxu0 0.0
        %613 = vmatprep.subr.mxu0 0.0
        %614 = vmatpush1.msra.mxu0 0.0
        %615 = vmatprep.subr.mxu0 0.0
        %616 = vmatpush1.msra.mxu0 0.0
        %617 = vmatprep.subr.mxu0 0.0
        %618 = vmatpush1.msra.mxu0 0.0
        %619 = vmatprep.subr.mxu0 0.0
        %620 = vmatpush1.msra.mxu0 0.0
        %621 = vmatprep.subr.mxu0 0.0
        %622 = vmatpush1.msra.mxu0 0.0
        %623 = vmatprep.subr.mxu0 0.0
        %624 = vmatpush1.msra.mxu0 0.0
        %625 = vmatprep.subr.mxu0 0.0
        %626 = vmatpush1.msra.mxu0 0.0
        %627 = vmatprep.subr.mxu0 0.0
        %628 = vmatpush1.msra.mxu0 %v501
        %629 = vmatprep.subr.mxu0 0.0
        %630 = vmatpush1.msra.mxu0 %v500
        %631 = vmatprep.subr.mxu0 0.0
        %632 = vmatpush2.msra.mxu0 0.0
        %633 = vmatprep.subr.mxu0 0.0
        %634 = vmatpush2.msra.mxu0 0.0
        %635 = vmatprep.subr.mxu0 0.0
        %636 = vmatpush2.msra.mxu0 0.0
        %637 = vmatprep.subr.mxu0 0.0
        %638 = vmatpush2.msra.mxu0 0.0
        %639 = vmatprep.subr.mxu0 0.0
        %640 = vmatpush2.msra.mxu0 0.0
        %641 = vmatprep.subr.mxu0 0.0
        %642 = vmatpush2.msra.mxu0 0.0
        %643 = vmatprep.subr.mxu0 0.0
        %644 = vmatpush2.msra.mxu0 0.0
        %645 = vmatprep.subr.mxu0 0.0
        %646 = vmatpush2.msra.mxu0 0.0
        %647 = vmatprep.subr.mxu0 0.0
        %648 = vmatpush2.msra.mxu0 0.0
        %649 = vmatprep.subr.mxu0 0.0
        %650 = vmatpush2.msra.mxu0 0.0
        %651 = vmatprep.subr.mxu0 0.0
        %652 = vmatpush2.msra.mxu0 0.0
        %653 = vmatprep.subr.mxu0 0.0
        %654 = vmatpush2.msra.mxu0 0.0
        %655 = vmatprep.subr.mxu0 0.0
        %656 = vmatpush2.msra.mxu0 0.0
        %657 = vmatprep.subr.mxu0 0.0
        %658 = vmatpush2.msra.mxu0 0.0
        %659 = vmatprep.subr.mxu0 0.0
        %660 = vmatpush2.msra.mxu0 0.0
        %661 = vmatprep.subr.mxu0 0.0
        %662 = vmatpush2.msra.mxu0 0.0
        %663 = vmatprep.mubr.f32.mxu0 0.0
        %664 = vmatmul.mubr.f32.gmra.mxu0 %v504
        %v665 = vpop.f32.mrf.mxu0
        %v666 = vadd.f32 0.0, %v665
        %v667 = vpop.f32.mrf.mxu0
        %668 = vmatprep.mubr.f32.mxu0 0.0
        %669 = vmatmul.mubr.f32.gmra.mxu0 %v507
        %v670 = vpop.f32.mrf.mxu0
        %v671 = vadd.f32 0.0, %v670
        %v672 = vpop.f32.mrf.mxu0
        %673 = vmatprep.mubr.f32.mxu0 0.0
        %674 = vmatmul.mubr.f32.gmra.mxu0 %v510
        %v675 = vpop.f32.mrf.mxu0
        %v676 = vadd.f32 0.0, %v675
        %v677 = vpop.f32.mrf.mxu0
        %678 = vmatprep.mubr.f32.mxu0 0.0
        %679 = vmatmul.mubr.f32.gmra.mxu0 %v513
        %v680 = vpop.f32.mrf.mxu0
        %v681 = vadd.f32 0.0, %v680
        %v682 = vpop.f32.mrf.mxu0
        %683 = vmatprep.mubr.f32.mxu0 0.0
        %684 = vmatmul.mubr.f32.gmra.mxu0 %v516
        %v685 = vpop.f32.mrf.mxu0
        %v686 = vadd.f32 0.0, %v685
        %v687 = vpop.f32.mrf.mxu0
        %688 = vmatprep.mubr.f32.mxu0 0.0
        %689 = vmatmul.mubr.f32.gmra.mxu0 %v519
        %v690 = vpop.f32.mrf.mxu0
        %v691 = vadd.f32 0.0, %v690
        %v692 = vpop.f32.mrf.mxu0
        %693 = vmatprep.mubr.f32.mxu0 0.0
        %694 = vmatmul.mubr.f32.gmra.mxu0 %v522
        %v695 = vpop.f32.mrf.mxu0
        %v696 = vadd.f32 0.0, %v695
        %v697 = vpop.f32.mrf.mxu0
        %698 = vmatprep.mubr.f32.mxu0 0.0
        %699 = vmatmul.mubr.f32.gmra.mxu0 %v525
        %v700 = vpop.f32.mrf.mxu0
        %v701 = vadd.f32 0.0, %v700
        %v702 = vpop.f32.mrf.mxu0
        %703 = vmatprep.mubr.f32.mxu0 0.0
        %704 = vmatmul.mubr.f32.gmra.mxu0 %v528
        %v705 = vpop.f32.mrf.mxu0
        %v706 = vadd.f32 0.0, %v705
        %v707 = vpop.f32.mrf.mxu0
        %708 = vmatprep.mubr.f32.mxu0 0.0
        %709 = vmatmul.mubr.f32.gmra.mxu0 %v531
        %v710 = vpop.f32.mrf.mxu0
        %v711 = vadd.f32 0.0, %v710
        %v712 = vpop.f32.mrf.mxu0
        %713 = vmatprep.mubr.f32.mxu0 0.0
        %714 = vmatmul.mubr.f32.gmra.mxu0 %v534
        %v715 = vpop.f32.mrf.mxu0
        %v716 = vadd.f32 0.0, %v715
        %v717 = vpop.f32.mrf.mxu0
        %718 = vmatprep.mubr.f32.mxu0 0.0
        %719 = vmatmul.mubr.f32.gmra.mxu0 %v537
        %v720 = vpop.f32.mrf.mxu0
        %v721 = vadd.f32 0.0, %v720
        %v722 = vpop.f32.mrf.mxu0
        %723 = vmatprep.mubr.f32.mxu0 0.0
        %724 = vmatmul.mubr.f32.gmra.mxu0 %v540
        %v725 = vpop.f32.mrf.mxu0
        %v726 = vadd.f32 0.0, %v725
        %v727 = vpop.f32.mrf.mxu0
        %728 = vmatprep.mubr.f32.mxu0 0.0
        %729 = vmatmul.mubr.f32.gmra.mxu0 %v543
        %v730 = vpop.f32.mrf.mxu0
        %v731 = vadd.f32 0.0, %v730
        %v732 = vpop.f32.mrf.mxu0
        %733 = vmatprep.mubr.f32.mxu0 0.0
        %734 = vmatmul.mubr.f32.gmra.mxu0 %v546
        %v735 = vpop.f32.mrf.mxu0
        %v736 = vadd.f32 0.0, %v735
        %v737 = vpop.f32.mrf.mxu0
        %738 = vmatprep.mubr.f32.mxu0 0.0
        %739 = vmatmul.mubr.f32.gmra.mxu0 %v549
        %v740 = vpop.f32.mrf.mxu0
        %v741 = vadd.f32 0.0, %v740
        %v742 = vpop.f32.mrf.mxu0
        %743 = vmatprep.mubr.f32.mxu0 0.0
        %744 = vmatmul.mubr.f32.gmra.mxu0 %v552
        %v745 = vpop.f32.mrf.mxu0
        %v746 = vadd.f32 0.0, %v745
        %v747 = vpop.f32.mrf.mxu0
        %748 = vmatprep.mubr.f32.mxu0 0.0
        %749 = vmatmul.mubr.f32.gmra.mxu0 %v555
        %v750 = vpop.f32.mrf.mxu0
        %v751 = vadd.f32 0.0, %v750
        %v752 = vpop.f32.mrf.mxu0
        %753 = vmatprep.mubr.f32.mxu0 0.0
        %754 = vmatmul.mubr.f32.gmra.mxu0 %v558
        %v755 = vpop.f32.mrf.mxu0
        %v756 = vadd.f32 0.0, %v755
        %v757 = vpop.f32.mrf.mxu0
        %758 = vmatprep.mubr.f32.mxu0 0.0
        %759 = vmatmul.mubr.f32.gmra.mxu0 %v561
        %v760 = vpop.f32.mrf.mxu0
        %v761 = vadd.f32 0.0, %v760
        %v762 = vpop.f32.mrf.mxu0
        %763 = vmatprep.mubr.f32.mxu0 0.0
        %764 = vmatmul.mubr.f32.gmra.mxu0 %v564
        %v765 = vpop.f32.mrf.mxu0
        %v766 = vadd.f32 0.0, %v765
        %v767 = vpop.f32.mrf.mxu0
        %768 = vmatprep.mubr.f32.mxu0 0.0
        %769 = vmatmul.mubr.f32.gmra.mxu0 %v567
        %v770 = vpop.f32.mrf.mxu0
        %v771 = vadd.f32 0.0, %v770
        %v772 = vpop.f32.mrf.mxu0
        %773 = vmatprep.mubr.f32.mxu0 0.0
        %774 = vmatmul.mubr.f32.gmra.mxu0 %v570
        %v775 = vpop.f32.mrf.mxu0
        %v776 = vadd.f32 0.0, %v775
        %v777 = vpop.f32.mrf.mxu0
        %778 = vmatprep.mubr.f32.mxu0 0.0
        %779 = vmatmul.mubr.f32.gmra.mxu0 %v573
        %v780 = vpop.f32.mrf.mxu0
        %v781 = vadd.f32 0.0, %v780
        %v782 = vpop.f32.mrf.mxu0
        %783 = vmatprep.mubr.f32.mxu0 0.0
        %784 = vmatmul.mubr.f32.gmra.mxu0 %v576
        %v785 = vpop.f32.mrf.mxu0
        %v786 = vadd.f32 0.0, %v785
        %v787 = vpop.f32.mrf.mxu0
        %788 = vmatprep.mubr.f32.mxu0 0.0
        %789 = vmatmul.mubr.f32.gmra.mxu0 %v579
        %v790 = vpop.f32.mrf.mxu0
        %v791 = vadd.f32 0.0, %v790
        %v792 = vpop.f32.mrf.mxu0
        %793 = vmatprep.mubr.f32.mxu0 0.0
        %794 = vmatmul.mubr.f32.gmra.mxu0 %v582
        %v795 = vpop.f32.mrf.mxu0
        %v796 = vadd.f32 0.0, %v795
        %v797 = vpop.f32.mrf.mxu0
        %798 = vmatprep.mubr.f32.mxu0 0.0
        %799 = vmatmul.mubr.f32.gmra.mxu0 %v585
        %v800 = vpop.f32.mrf.mxu0
        %v801 = vadd.f32 0.0, %v800
        %v802 = vpop.f32.mrf.mxu0
        %803 = vmatprep.mubr.f32.mxu0 0.0
        %804 = vmatmul.mubr.f32.gmra.mxu0 %v588
        %v805 = vpop.f32.mrf.mxu0
        %v806 = vadd.f32 0.0, %v805
        %v807 = vpop.f32.mrf.mxu0
        %808 = vmatprep.mubr.f32.mxu0 0.0
        %809 = vmatmul.mubr.f32.gmra.mxu0 %v591
        %v810 = vpop.f32.mrf.mxu0
        %v811 = vadd.f32 0.0, %v810
        %v812 = vpop.f32.mrf.mxu0
        %813 = vmatprep.mubr.f32.mxu0 0.0
        %814 = vmatmul.mubr.f32.gmra.mxu0 %v594
        %v815 = vpop.f32.mrf.mxu0
        %v816 = vadd.f32 0.0, %v815
        %v817 = vpop.f32.mrf.mxu0
        %818 = vmatprep.mubr.f32.mxu0 0.0
        %819 = vmatmul.mubr.f32.gmra.mxu0 %v597
        %v820 = vpop.f32.mrf.mxu0
        %v821 = vadd.f32 0.0, %v820
        %v822 = vpop.f32.mrf.mxu0
        %823 = vdwg.mxu0
        %vm824 = vcmask 261120
        %v826 = vsel %vm824, %v432, 0
        %v829 = vsel %vm824, %v433, 0
        %v832 = vsel %vm824, %v434, 0
        %v835 = vsel %vm824, %v435, 0
        %v838 = vsel %vm824, %v436, 0
        %v841 = vsel %vm824, %v437, 0
        %v844 = vsel %vm824, %v438, 0
        %v847 = vsel %vm824, %v439, 0
        %v850 = vsel %vm824, %v440, 0
        %v853 = vsel %vm824, %v441, 0
        %v856 = vsel %vm824, %v442, 0
        %v859 = vsel %vm824, %v443, 0
        %v862 = vsel %vm824, %v444, 0
        %v865 = vsel %vm824, %v445, 0
        %v868 = vsel %vm824, %v446, 0
        %v871 = vsel %vm824, %v447, 0
        %v874 = vsel %vm824, %v448, 0
        %v877 = vsel %vm824, %v449, 0
        %v880 = vsel %vm824, %v450, 0
        %v883 = vsel %vm824, %v451, 0
        %v886 = vsel %vm824, %v452, 0
        %v889 = vsel %vm824, %v453, 0
        %v892 = vsel %vm824, %v454, 0
        %v895 = vsel %vm824, %v455, 0
        %v898 = vsel %vm824, %v456, 0
        %v901 = vsel %vm824, %v457, 0
        %v904 = vsel %vm824, %v458, 0
        %v907 = vsel %vm824, %v459, 0
        %v910 = vsel %vm824, %v460, 0
        %v913 = vsel %vm824, %v461, 0
        %v916 = vsel %vm824, %v462, 0
        %v919 = vsel %vm824, %v463, 0
        %921 = vmatprep.subr.mxu0 0.0
        %922 = vmatpush1.msra.mxu0 0.0
        %923 = vmatprep.subr.mxu0 0.0
        %924 = vmatpush1.msra.mxu0 0.0
        %925 = vmatprep.subr.mxu0 0.0
        %926 = vmatpush1.msra.mxu0 0.0
        %927 = vmatprep.subr.mxu0 0.0
        %928 = vmatpush1.msra.mxu0 0.0
        %929 = vmatprep.subr.mxu0 0.0
        %930 = vmatpush1.msra.mxu0 0.0
        %931 = vmatprep.subr.mxu0 0.0
        %932 = vmatpush1.msra.mxu0 0.0
        %933 = vmatprep.subr.mxu0 0.0
        %934 = vmatpush1.msra.mxu0 0.0
        %935 = vmatprep.subr.mxu0 0.0
        %936 = vmatpush1.msra.mxu0 0.0
        %937 = vmatprep.subr.mxu0 0.0
        %938 = vmatpush1.msra.mxu0 0.0
        %939 = vmatprep.subr.mxu0 0.0
        %940 = vmatpush1.msra.mxu0 0.0
        %941 = vmatprep.subr.mxu0 0.0
        %942 = vmatpush1.msra.mxu0 0.0
        %943 = vmatprep.subr.mxu0 0.0
        %944 = vmatpush1.msra.mxu0 0.0
        %945 = vmatprep.subr.mxu0 0.0
        %946 = vmatpush1.msra.mxu0 %v467
        %947 = vmatprep.subr.mxu0 0.0
        %948 = vmatpush1.msra.mxu0 %v466
        %949 = vmatprep.subr.mxu0 0.0
        %950 = vmatpush1.msra.mxu0 %v465
        %951 = vmatprep.subr.mxu0 0.0
        %952 = vmatpush1.msra.mxu0 %v464
        %953 = vmatprep.subr.mxu0 0.0
        %954 = vmatpush2.msra.mxu0 0.0
        %955 = vmatprep.subr.mxu0 0.0
        %956 = vmatpush2.msra.mxu0 0.0
        %957 = vmatprep.subr.mxu0 0.0
        %958 = vmatpush2.msra.mxu0 0.0
        %959 = vmatprep.subr.mxu0 0.0
        %960 = vmatpush2.msra.mxu0 0.0
        %961 = vmatprep.subr.mxu0 0.0
        %962 = vmatpush2.msra.mxu0 0.0
        %963 = vmatprep.subr.mxu0 0.0
        %964 = vmatpush2.msra.mxu0 0.0
        %965 = vmatprep.subr.mxu0 0.0
        %966 = vmatpush2.msra.mxu0 0.0
        %967 = vmatprep.subr.mxu0 0.0
        %968 = vmatpush2.msra.mxu0 0.0
        %969 = vmatprep.subr.mxu0 0.0
        %970 = vmatpush2.msra.mxu0 0.0
        %971 = vmatprep.subr.mxu0 0.0
        %972 = vmatpush2.msra.mxu0 0.0
        %973 = vmatprep.subr.mxu0 0.0
        %974 = vmatpush2.msra.mxu0 0.0
        %975 = vmatprep.subr.mxu0 0.0
        %976 = vmatpush2.msra.mxu0 0.0
        %977 = vmatprep.subr.mxu0 0.0
        %978 = vmatpush2.msra.mxu0 0.0
        %979 = vmatprep.subr.mxu0 0.0
        %980 = vmatpush2.msra.mxu0 0.0
        %981 = vmatprep.subr.mxu0 0.0
        %982 = vmatpush2.msra.mxu0 0.0
        %983 = vmatprep.subr.mxu0 0.0
        %984 = vmatpush2.msra.mxu0 0.0
        %985 = vmatprep.mubr.f32.mxu0 0.0
        %986 = vmatmul.mubr.f32.gmra.mxu0 %v826
        %v987 = vpop.f32.mrf.mxu0
        %v988 = vadd.f32 %v666, %v987
        %v989 = vpop.f32.mrf.mxu0
        %990 = vmatprep.mubr.f32.mxu0 0.0
        %991 = vmatmul.mubr.f32.gmra.mxu0 %v829
        %v992 = vpop.f32.mrf.mxu0
        %v993 = vadd.f32 %v671, %v992
        %v994 = vpop.f32.mrf.mxu0
        %995 = vmatprep.mubr.f32.mxu0 0.0
        %996 = vmatmul.mubr.f32.gmra.mxu0 %v832
        %v997 = vpop.f32.mrf.mxu0
        %v998 = vadd.f32 %v676, %v997
        %v999 = vpop.f32.mrf.mxu0
        %1000 = vmatprep.mubr.f32.mxu0 0.0
        %1001 = vmatmul.mubr.f32.gmra.mxu0 %v835
        %v1002 = vpop.f32.mrf.mxu0
        %v1003 = vadd.f32 %v681, %v1002
        %v1004 = vpop.f32.mrf.mxu0
        %1005 = vmatprep.mubr.f32.mxu0 0.0
        %1006 = vmatmul.mubr.f32.gmra.mxu0 %v838
        %v1007 = vpop.f32.mrf.mxu0
        %v1008 = vadd.f32 %v686, %v1007
        %v1009 = vpop.f32.mrf.mxu0
        %1010 = vmatprep.mubr.f32.mxu0 0.0
        %1011 = vmatmul.mubr.f32.gmra.mxu0 %v841
        %v1012 = vpop.f32.mrf.mxu0
        %v1013 = vadd.f32 %v691, %v1012
        %v1014 = vpop.f32.mrf.mxu0
        %1015 = vmatprep.mubr.f32.mxu0 0.0
        %1016 = vmatmul.mubr.f32.gmra.mxu0 %v844
        %v1017 = vpop.f32.mrf.mxu0
        %v1018 = vadd.f32 %v696, %v1017
        %v1019 = vpop.f32.mrf.mxu0
        %1020 = vmatprep.mubr.f32.mxu0 0.0
        %1021 = vmatmul.mubr.f32.gmra.mxu0 %v847
        %v1022 = vpop.f32.mrf.mxu0
        %v1023 = vadd.f32 %v701, %v1022
        %v1024 = vpop.f32.mrf.mxu0
        %1025 = vmatprep.mubr.f32.mxu0 0.0
        %1026 = vmatmul.mubr.f32.gmra.mxu0 %v850
        %v1027 = vpop.f32.mrf.mxu0
        %v1028 = vadd.f32 %v706, %v1027
        %v1029 = vpop.f32.mrf.mxu0
        %1030 = vmatprep.mubr.f32.mxu0 0.0
        %1031 = vmatmul.mubr.f32.gmra.mxu0 %v853
        %v1032 = vpop.f32.mrf.mxu0
        %v1033 = vadd.f32 %v711, %v1032
        %v1034 = vpop.f32.mrf.mxu0
        %1035 = vmatprep.mubr.f32.mxu0 0.0
        %1036 = vmatmul.mubr.f32.gmra.mxu0 %v856
        %v1037 = vpop.f32.mrf.mxu0
        %v1038 = vadd.f32 %v716, %v1037
        %v1039 = vpop.f32.mrf.mxu0
        %1040 = vmatprep.mubr.f32.mxu0 0.0
        %1041 = vmatmul.mubr.f32.gmra.mxu0 %v859
        %v1042 = vpop.f32.mrf.mxu0
        %v1043 = vadd.f32 %v721, %v1042
        %v1044 = vpop.f32.mrf.mxu0
        %1045 = vmatprep.mubr.f32.mxu0 0.0
        %1046 = vmatmul.mubr.f32.gmra.mxu0 %v862
        %v1047 = vpop.f32.mrf.mxu0
        %v1048 = vadd.f32 %v726, %v1047
        %v1049 = vpop.f32.mrf.mxu0
        %1050 = vmatprep.mubr.f32.mxu0 0.0
        %1051 = vmatmul.mubr.f32.gmra.mxu0 %v865
        %v1052 = vpop.f32.mrf.mxu0
        %v1053 = vadd.f32 %v731, %v1052
        %v1054 = vpop.f32.mrf.mxu0
        %1055 = vmatprep.mubr.f32.mxu0 0.0
        %1056 = vmatmul.mubr.f32.gmra.mxu0 %v868
        %v1057 = vpop.f32.mrf.mxu0
        %v1058 = vadd.f32 %v736, %v1057
        %v1059 = vpop.f32.mrf.mxu0
        %1060 = vmatprep.mubr.f32.mxu0 0.0
        %1061 = vmatmul.mubr.f32.gmra.mxu0 %v871
        %v1062 = vpop.f32.mrf.mxu0
        %v1063 = vadd.f32 %v741, %v1062
        %v1064 = vpop.f32.mrf.mxu0
        %1065 = vmatprep.mubr.f32.mxu0 0.0
        %1066 = vmatmul.mubr.f32.gmra.mxu0 %v874
        %v1067 = vpop.f32.mrf.mxu0
        %v1068 = vadd.f32 %v746, %v1067
        %v1069 = vpop.f32.mrf.mxu0
        %1070 = vmatprep.mubr.f32.mxu0 0.0
        %1071 = vmatmul.mubr.f32.gmra.mxu0 %v877
        %v1072 = vpop.f32.mrf.mxu0
        %v1073 = vadd.f32 %v751, %v1072
        %v1074 = vpop.f32.mrf.mxu0
        %1075 = vmatprep.mubr.f32.mxu0 0.0
        %1076 = vmatmul.mubr.f32.gmra.mxu0 %v880
        %v1077 = vpop.f32.mrf.mxu0
        %v1078 = vadd.f32 %v756, %v1077
        %v1079 = vpop.f32.mrf.mxu0
        %1080 = vmatprep.mubr.f32.mxu0 0.0
        %1081 = vmatmul.mubr.f32.gmra.mxu0 %v883
        %v1082 = vpop.f32.mrf.mxu0
        %v1083 = vadd.f32 %v761, %v1082
        %v1084 = vpop.f32.mrf.mxu0
        %1085 = vmatprep.mubr.f32.mxu0 0.0
        %1086 = vmatmul.mubr.f32.gmra.mxu0 %v886
        %v1087 = vpop.f32.mrf.mxu0
        %v1088 = vadd.f32 %v766, %v1087
        %v1089 = vpop.f32.mrf.mxu0
        %1090 = vmatprep.mubr.f32.mxu0 0.0
        %1091 = vmatmul.mubr.f32.gmra.mxu0 %v889
        %v1092 = vpop.f32.mrf.mxu0
        %v1093 = vadd.f32 %v771, %v1092
        %v1094 = vpop.f32.mrf.mxu0
        %1095 = vmatprep.mubr.f32.mxu0 0.0
        %1096 = vmatmul.mubr.f32.gmra.mxu0 %v892
        %v1097 = vpop.f32.mrf.mxu0
        %v1098 = vadd.f32 %v776, %v1097
        %v1099 = vpop.f32.mrf.mxu0
        %1100 = vmatprep.mubr.f32.mxu0 0.0
        %1101 = vmatmul.mubr.f32.gmra.mxu0 %v895
        %v1102 = vpop.f32.mrf.mxu0
        %v1103 = vadd.f32 %v781, %v1102
        %v1104 = vpop.f32.mrf.mxu0
        %1105 = vmatprep.mubr.f32.mxu0 0.0
        %1106 = vmatmul.mubr.f32.gmra.mxu0 %v898
        %v1107 = vpop.f32.mrf.mxu0
        %v1108 = vadd.f32 %v786, %v1107
        %v1109 = vpop.f32.mrf.mxu0
        %1110 = vmatprep.mubr.f32.mxu0 0.0
        %1111 = vmatmul.mubr.f32.gmra.mxu0 %v901
        %v1112 = vpop.f32.mrf.mxu0
        %v1113 = vadd.f32 %v791, %v1112
        %v1114 = vpop.f32.mrf.mxu0
        %1115 = vmatprep.mubr.f32.mxu0 0.0
        %1116 = vmatmul.mubr.f32.gmra.mxu0 %v904
        %v1117 = vpop.f32.mrf.mxu0
        %v1118 = vadd.f32 %v796, %v1117
        %v1119 = vpop.f32.mrf.mxu0
        %1120 = vmatprep.mubr.f32.mxu0 0.0
        %1121 = vmatmul.mubr.f32.gmra.mxu0 %v907
        %v1122 = vpop.f32.mrf.mxu0
        %v1123 = vadd.f32 %v801, %v1122
        %v1124 = vpop.f32.mrf.mxu0
        %1125 = vmatprep.mubr.f32.mxu0 0.0
        %1126 = vmatmul.mubr.f32.gmra.mxu0 %v910
        %v1127 = vpop.f32.mrf.mxu0
        %v1128 = vadd.f32 %v806, %v1127
        %v1129 = vpop.f32.mrf.mxu0
        %1130 = vmatprep.mubr.f32.mxu0 0.0
        %1131 = vmatmul.mubr.f32.gmra.mxu0 %v913
        %v1132 = vpop.f32.mrf.mxu0
        %v1133 = vadd.f32 %v811, %v1132
        %v1134 = vpop.f32.mrf.mxu0
        %1135 = vmatprep.mubr.f32.mxu0 0.0
        %1136 = vmatmul.mubr.f32.gmra.mxu0 %v916
        %v1137 = vpop.f32.mrf.mxu0
        %v1138 = vadd.f32 %v816, %v1137
        %v1139 = vpop.f32.mrf.mxu0
        %1140 = vmatprep.mubr.f32.mxu0 0.0
        %1141 = vmatmul.mubr.f32.gmra.mxu0 %v919
        %v1142 = vpop.f32.mrf.mxu0
        %v1143 = vadd.f32 %v821, %v1142
        %v1144 = vpop.f32.mrf.mxu0
        %1145 = vdwg.mxu0
        %v1146 = vld [vmem:[%s429] sm:$0xff]
        %v1147 = vld [vmem:[%s429 + $0x8] sm:$0xff]
        %v1148 = vld [vmem:[%s429 + $0x10] sm:$0xff]
        %v1149 = vld [vmem:[%s429 + $0x18] sm:$0xff]
        %v1150 = vld [vmem:[%s429 + $0x20] sm:$0xff]
        %v1151 = vld [vmem:[%s429 + $0x28] sm:$0xff]
        %v1152 = vld [vmem:[%s429 + $0x30] sm:$0xff]
        %v1153 = vld [vmem:[%s429 + $0x38] sm:$0xff]
        %v1154 = vld [vmem:[%s429 + $0x40] sm:$0xff]
        %v1155 = vld [vmem:[%s429 + $0x48] sm:$0xff]
        %v1156 = vld [vmem:[%s429 + $0x50] sm:$0xff]
        %v1157 = vld [vmem:[%s429 + $0x58] sm:$0xff]
        %v1158 = vld [vmem:[%s429 + $0x60] sm:$0xff]
        %v1159 = vld [vmem:[%s429 + $0x68] sm:$0xff]
        %v1160 = vld [vmem:[%s429 + $0x70] sm:$0xff]
        %v1161 = vld [vmem:[%s429 + $0x78] sm:$0xff]
        %v1162 = vld [vmem:[%s429 + $0x80] sm:$0xff]
        %v1163 = vld [vmem:[%s429 + $0x88] sm:$0xff]
        %v1164 = vld [vmem:[%s429 + $0x90] sm:$0xff]
        %v1165 = vld [vmem:[%s429 + $0x98] sm:$0xff]
        %v1166 = vld [vmem:[%s429 + $0xa0] sm:$0xff]
        %v1167 = vld [vmem:[%s429 + $0xa8] sm:$0xff]
        %v1168 = vld [vmem:[%s429 + $0xb0] sm:$0xff]
        %v1169 = vld [vmem:[%s429 + $0xb8] sm:$0xff]
        %v1170 = vld [vmem:[%s429 + $0xc0] sm:$0xff]
        %v1171 = vld [vmem:[%s429 + $0xc8] sm:$0xff]
        %v1172 = vld [vmem:[%s429 + $0xd0] sm:$0xff]
        %v1173 = vld [vmem:[%s429 + $0xd8] sm:$0xff]
        %v1174 = vld [vmem:[%s429 + $0xe0] sm:$0xff]
        %v1175 = vld [vmem:[%s429 + $0xe8] sm:$0xff]
        %v1176 = vld [vmem:[%s429 + $0xf0] sm:$0xff]
        %v1177 = vld [vmem:[%s429 + $0xf8] sm:$0xff]
        %v1178 = vld [vmem:[%s5] sm:$0xff]
        %v1179 = vld [vmem:[%s5 + $0x8] sm:$0xff]
        %v1181 = vsel %vm502, %v1146, 0
        %v1184 = vsel %vm502, %v1147, 0
        %v1187 = vsel %vm502, %v1148, 0
        %v1190 = vsel %vm502, %v1149, 0
        %v1193 = vsel %vm502, %v1150, 0
        %v1196 = vsel %vm502, %v1151, 0
        %v1199 = vsel %vm502, %v1152, 0
        %v1202 = vsel %vm502, %v1153, 0
        %v1205 = vsel %vm502, %v1154, 0
        %v1208 = vsel %vm502, %v1155, 0
        %v1211 = vsel %vm502, %v1156, 0
        %v1214 = vsel %vm502, %v1157, 0
        %v1217 = vsel %vm502, %v1158, 0
        %v1220 = vsel %vm502, %v1159, 0
        %v1223 = vsel %vm502, %v1160, 0
        %v1226 = vsel %vm502, %v1161, 0
        %v1229 = vsel %vm502, %v1162, 0
        %v1232 = vsel %vm502, %v1163, 0
        %v1235 = vsel %vm502, %v1164, 0
        %v1238 = vsel %vm502, %v1165, 0
        %v1241 = vsel %vm502, %v1166, 0
        %v1244 = vsel %vm502, %v1167, 0
        %v1247 = vsel %vm502, %v1168, 0
        %v1250 = vsel %vm502, %v1169, 0
        %v1253 = vsel %vm502, %v1170, 0
        %v1256 = vsel %vm502, %v1171, 0
        %v1259 = vsel %vm502, %v1172, 0
        %v1262 = vsel %vm502, %v1173, 0
        %v1265 = vsel %vm502, %v1174, 0
        %v1268 = vsel %vm502, %v1175, 0
        %v1271 = vsel %vm502, %v1176, 0
        %v1274 = vsel %vm502, %v1177, 0
        %1276 = vmatprep.subr.mxu0 0.0
        %1277 = vmatpush1.msra.mxu0 0.0
        %1278 = vmatprep.subr.mxu0 0.0
        %1279 = vmatpush1.msra.mxu0 0.0
        %1280 = vmatprep.subr.mxu0 0.0
        %1281 = vmatpush1.msra.mxu0 0.0
        %1282 = vmatprep.subr.mxu0 0.0
        %1283 = vmatpush1.msra.mxu0 0.0
        %1284 = vmatprep.subr.mxu0 0.0
        %1285 = vmatpush1.msra.mxu0 0.0
        %1286 = vmatprep.subr.mxu0 0.0
        %1287 = vmatpush1.msra.mxu0 0.0
        %1288 = vmatprep.subr.mxu0 0.0
        %1289 = vmatpush1.msra.mxu0 0.0
        %1290 = vmatprep.subr.mxu0 0.0
        %1291 = vmatpush1.msra.mxu0 0.0
        %1292 = vmatprep.subr.mxu0 0.0
        %1293 = vmatpush1.msra.mxu0 0.0
        %1294 = vmatprep.subr.mxu0 0.0
        %1295 = vmatpush1.msra.mxu0 0.0
        %1296 = vmatprep.subr.mxu0 0.0
        %1297 = vmatpush1.msra.mxu0 0.0
        %1298 = vmatprep.subr.mxu0 0.0
        %1299 = vmatpush1.msra.mxu0 0.0
        %1300 = vmatprep.subr.mxu0 0.0
        %1301 = vmatpush1.msra.mxu0 0.0
        %1302 = vmatprep.subr.mxu0 0.0
        %1303 = vmatpush1.msra.mxu0 0.0
        %1304 = vmatprep.subr.mxu0 0.0
        %1305 = vmatpush1.msra.mxu0 %v1179
        %1306 = vmatprep.subr.mxu0 0.0
        %1307 = vmatpush1.msra.mxu0 %v1178
        %1308 = vmatprep.subr.mxu0 0.0
        %1309 = vmatpush2.msra.mxu0 0.0
        %1310 = vmatprep.subr.mxu0 0.0
        %1311 = vmatpush2.msra.mxu0 0.0
        %1312 = vmatprep.subr.mxu0 0.0
        %1313 = vmatpush2.msra.mxu0 0.0
        %1314 = vmatprep.subr.mxu0 0.0
        %1315 = vmatpush2.msra.mxu0 0.0
        %1316 = vmatprep.subr.mxu0 0.0
        %1317 = vmatpush2.msra.mxu0 0.0
        %1318 = vmatprep.subr.mxu0 0.0
        %1319 = vmatpush2.msra.mxu0 0.0
        %1320 = vmatprep.subr.mxu0 0.0
        %1321 = vmatpush2.msra.mxu0 0.0
        %1322 = vmatprep.subr.mxu0 0.0
        %1323 = vmatpush2.msra.mxu0 0.0
        %1324 = vmatprep.subr.mxu0 0.0
        %1325 = vmatpush2.msra.mxu0 0.0
        %1326 = vmatprep.subr.mxu0 0.0
        %1327 = vmatpush2.msra.mxu0 0.0
        %1328 = vmatprep.subr.mxu0 0.0
        %1329 = vmatpush2.msra.mxu0 0.0
        %1330 = vmatprep.subr.mxu0 0.0
        %1331 = vmatpush2.msra.mxu0 0.0
        %1332 = vmatprep.subr.mxu0 0.0
        %1333 = vmatpush2.msra.mxu0 0.0
        %1334 = vmatprep.subr.mxu0 0.0
        %1335 = vmatpush2.msra.mxu0 0.0
        %1336 = vmatprep.subr.mxu0 0.0
        %1337 = vmatpush2.msra.mxu0 0.0
        %1338 = vmatprep.subr.mxu0 0.0
        %1339 = vmatpush2.msra.mxu0 0.0
        %1340 = vmatprep.mubr.f32.mxu0 0.0
        %1341 = vmatmul.mubr.f32.gmra.mxu0 %v1181
        %v1342 = vpop.f32.mrf.mxu0
        %v1343 = vadd.f32 0.0, %v1342
        %v1344 = vpop.f32.mrf.mxu0
        %1345 = vmatprep.mubr.f32.mxu0 0.0
        %1346 = vmatmul.mubr.f32.gmra.mxu0 %v1184
        %v1347 = vpop.f32.mrf.mxu0
        %v1348 = vadd.f32 0.0, %v1347
        %v1349 = vpop.f32.mrf.mxu0
        %1350 = vmatprep.mubr.f32.mxu0 0.0
        %1351 = vmatmul.mubr.f32.gmra.mxu0 %v1187
        %v1352 = vpop.f32.mrf.mxu0
        %v1353 = vadd.f32 0.0, %v1352
        %v1354 = vpop.f32.mrf.mxu0
        %1355 = vmatprep.mubr.f32.mxu0 0.0
        %1356 = vmatmul.mubr.f32.gmra.mxu0 %v1190
        %v1357 = vpop.f32.mrf.mxu0
        %v1358 = vadd.f32 0.0, %v1357
        %v1359 = vpop.f32.mrf.mxu0
        %1360 = vmatprep.mubr.f32.mxu0 0.0
        %1361 = vmatmul.mubr.f32.gmra.mxu0 %v1193
        %v1362 = vpop.f32.mrf.mxu0
        %v1363 = vadd.f32 0.0, %v1362
        %v1364 = vpop.f32.mrf.mxu0
        %1365 = vmatprep.mubr.f32.mxu0 0.0
        %1366 = vmatmul.mubr.f32.gmra.mxu0 %v1196
        %v1367 = vpop.f32.mrf.mxu0
        %v1368 = vadd.f32 0.0, %v1367
        %v1369 = vpop.f32.mrf.mxu0
        %1370 = vmatprep.mubr.f32.mxu0 0.0
        %1371 = vmatmul.mubr.f32.gmra.mxu0 %v1199
        %v1372 = vpop.f32.mrf.mxu0
        %v1373 = vadd.f32 0.0, %v1372
        %v1374 = vpop.f32.mrf.mxu0
        %1375 = vmatprep.mubr.f32.mxu0 0.0
        %1376 = vmatmul.mubr.f32.gmra.mxu0 %v1202
        %v1377 = vpop.f32.mrf.mxu0
        %v1378 = vadd.f32 0.0, %v1377
        %v1379 = vpop.f32.mrf.mxu0
        %1380 = vmatprep.mubr.f32.mxu0 0.0
        %1381 = vmatmul.mubr.f32.gmra.mxu0 %v1205
        %v1382 = vpop.f32.mrf.mxu0
        %v1383 = vadd.f32 0.0, %v1382
        %v1384 = vpop.f32.mrf.mxu0
        %1385 = vmatprep.mubr.f32.mxu0 0.0
        %1386 = vmatmul.mubr.f32.gmra.mxu0 %v1208
        %v1387 = vpop.f32.mrf.mxu0
        %v1388 = vadd.f32 0.0, %v1387
        %v1389 = vpop.f32.mrf.mxu0
        %1390 = vmatprep.mubr.f32.mxu0 0.0
        %1391 = vmatmul.mubr.f32.gmra.mxu0 %v1211
        %v1392 = vpop.f32.mrf.mxu0
        %v1393 = vadd.f32 0.0, %v1392
        %v1394 = vpop.f32.mrf.mxu0
        %1395 = vmatprep.mubr.f32.mxu0 0.0
        %1396 = vmatmul.mubr.f32.gmra.mxu0 %v1214
        %v1397 = vpop.f32.mrf.mxu0
        %v1398 = vadd.f32 0.0, %v1397
        %v1399 = vpop.f32.mrf.mxu0
        %1400 = vmatprep.mubr.f32.mxu0 0.0
        %1401 = vmatmul.mubr.f32.gmra.mxu0 %v1217
        %v1402 = vpop.f32.mrf.mxu0
        %v1403 = vadd.f32 0.0, %v1402
        %v1404 = vpop.f32.mrf.mxu0
        %1405 = vmatprep.mubr.f32.mxu0 0.0
        %1406 = vmatmul.mubr.f32.gmra.mxu0 %v1220
        %v1407 = vpop.f32.mrf.mxu0
        %v1408 = vadd.f32 0.0, %v1407
        %v1409 = vpop.f32.mrf.mxu0
        %1410 = vmatprep.mubr.f32.mxu0 0.0
        %1411 = vmatmul.mubr.f32.gmra.mxu0 %v1223
        %v1412 = vpop.f32.mrf.mxu0
        %v1413 = vadd.f32 0.0, %v1412
        %v1414 = vpop.f32.mrf.mxu0
        %1415 = vmatprep.mubr.f32.mxu0 0.0
        %1416 = vmatmul.mubr.f32.gmra.mxu0 %v1226
        %v1417 = vpop.f32.mrf.mxu0
        %v1418 = vadd.f32 0.0, %v1417
        %v1419 = vpop.f32.mrf.mxu0
        %1420 = vmatprep.mubr.f32.mxu0 0.0
        %1421 = vmatmul.mubr.f32.gmra.mxu0 %v1229
        %v1422 = vpop.f32.mrf.mxu0
        %v1423 = vadd.f32 0.0, %v1422
        %v1424 = vpop.f32.mrf.mxu0
        %1425 = vmatprep.mubr.f32.mxu0 0.0
        %1426 = vmatmul.mubr.f32.gmra.mxu0 %v1232
        %v1427 = vpop.f32.mrf.mxu0
        %v1428 = vadd.f32 0.0, %v1427
        %v1429 = vpop.f32.mrf.mxu0
        %1430 = vmatprep.mubr.f32.mxu0 0.0
        %1431 = vmatmul.mubr.f32.gmra.mxu0 %v1235
        %v1432 = vpop.f32.mrf.mxu0
        %v1433 = vadd.f32 0.0, %v1432
        %v1434 = vpop.f32.mrf.mxu0
        %1435 = vmatprep.mubr.f32.mxu0 0.0
        %1436 = vmatmul.mubr.f32.gmra.mxu0 %v1238
        %v1437 = vpop.f32.mrf.mxu0
        %v1438 = vadd.f32 0.0, %v1437
        %v1439 = vpop.f32.mrf.mxu0
        %1440 = vmatprep.mubr.f32.mxu0 0.0
        %1441 = vmatmul.mubr.f32.gmra.mxu0 %v1241
        %v1442 = vpop.f32.mrf.mxu0
        %v1443 = vadd.f32 0.0, %v1442
        %v1444 = vpop.f32.mrf.mxu0
        %1445 = vmatprep.mubr.f32.mxu0 0.0
        %1446 = vmatmul.mubr.f32.gmra.mxu0 %v1244
        %v1447 = vpop.f32.mrf.mxu0
        %v1448 = vadd.f32 0.0, %v1447
        %v1449 = vpop.f32.mrf.mxu0
        %1450 = vmatprep.mubr.f32.mxu0 0.0
        %1451 = vmatmul.mubr.f32.gmra.mxu0 %v1247
        %v1452 = vpop.f32.mrf.mxu0
        %v1453 = vadd.f32 0.0, %v1452
        %v1454 = vpop.f32.mrf.mxu0
        %1455 = vmatprep.mubr.f32.mxu0 0.0
        %1456 = vmatmul.mubr.f32.gmra.mxu0 %v1250
        %v1457 = vpop.f32.mrf.mxu0
        %v1458 = vadd.f32 0.0, %v1457
        %v1459 = vpop.f32.mrf.mxu0
        %1460 = vmatprep.mubr.f32.mxu0 0.0
        %1461 = vmatmul.mubr.f32.gmra.mxu0 %v1253
        %v1462 = vpop.f32.mrf.mxu0
        %v1463 = vadd.f32 0.0, %v1462
        %v1464 = vpop.f32.mrf.mxu0
        %1465 = vmatprep.mubr.f32.mxu0 0.0
        %1466 = vmatmul.mubr.f32.gmra.mxu0 %v1256
        %v1467 = vpop.f32.mrf.mxu0
        %v1468 = vadd.f32 0.0, %v1467
        %v1469 = vpop.f32.mrf.mxu0
        %1470 = vmatprep.mubr.f32.mxu0 0.0
        %1471 = vmatmul.mubr.f32.gmra.mxu0 %v1259
        %v1472 = vpop.f32.mrf.mxu0
        %v1473 = vadd.f32 0.0, %v1472
        %v1474 = vpop.f32.mrf.mxu0
        %1475 = vmatprep.mubr.f32.mxu0 0.0
        %1476 = vmatmul.mubr.f32.gmra.mxu0 %v1262
        %v1477 = vpop.f32.mrf.mxu0
        %v1478 = vadd.f32 0.0, %v1477
        %v1479 = vpop.f32.mrf.mxu0
        %1480 = vmatprep.mubr.f32.mxu0 0.0
        %1481 = vmatmul.mubr.f32.gmra.mxu0 %v1265
        %v1482 = vpop.f32.mrf.mxu0
        %v1483 = vadd.f32 0.0, %v1482
        %v1484 = vpop.f32.mrf.mxu0
        %1485 = vmatprep.mubr.f32.mxu0 0.0
        %1486 = vmatmul.mubr.f32.gmra.mxu0 %v1268
        %v1487 = vpop.f32.mrf.mxu0
        %v1488 = vadd.f32 0.0, %v1487
        %v1489 = vpop.f32.mrf.mxu0
        %1490 = vmatprep.mubr.f32.mxu0 0.0
        %1491 = vmatmul.mubr.f32.gmra.mxu0 %v1271
        %v1492 = vpop.f32.mrf.mxu0
        %v1493 = vadd.f32 0.0, %v1492
        %v1494 = vpop.f32.mrf.mxu0
        %1495 = vmatprep.mubr.f32.mxu0 0.0
        %1496 = vmatmul.mubr.f32.gmra.mxu0 %v1274
        %v1497 = vpop.f32.mrf.mxu0
        %v1498 = vadd.f32 0.0, %v1497
        %v1499 = vpop.f32.mrf.mxu0
        %1500 = vdwg.mxu0
        %v1501 = vadd.f32 %v988, %v1343
        %v1502 = vadd.f32 %v993, %v1348
        %v1503 = vadd.f32 %v998, %v1353
        %v1504 = vadd.f32 %v1003, %v1358
        %v1505 = vadd.f32 %v1008, %v1363
        %v1506 = vadd.f32 %v1013, %v1368
        %v1507 = vadd.f32 %v1018, %v1373
        %v1508 = vadd.f32 %v1023, %v1378
        %v1509 = vadd.f32 %v1028, %v1383
        %v1510 = vadd.f32 %v1033, %v1388
        %v1511 = vadd.f32 %v1038, %v1393
        %v1512 = vadd.f32 %v1043, %v1398
        %v1513 = vadd.f32 %v1048, %v1403
        %v1514 = vadd.f32 %v1053, %v1408
        %v1515 = vadd.f32 %v1058, %v1413
        %v1516 = vadd.f32 %v1063, %v1418
        %v1517 = vadd.f32 %v1068, %v1423
        %v1518 = vadd.f32 %v1073, %v1428
        %v1519 = vadd.f32 %v1078, %v1433
        %v1520 = vadd.f32 %v1083, %v1438
        %v1521 = vadd.f32 %v1088, %v1443
        %v1522 = vadd.f32 %v1093, %v1448
        %v1523 = vadd.f32 %v1098, %v1453
        %v1524 = vadd.f32 %v1103, %v1458
        %v1525 = vadd.f32 %v1108, %v1463
        %v1526 = vadd.f32 %v1113, %v1468
        %v1527 = vadd.f32 %v1118, %v1473
        %v1528 = vadd.f32 %v1123, %v1478
        %v1529 = vadd.f32 %v1128, %v1483
        %v1530 = vadd.f32 %v1133, %v1488
        %v1531 = vadd.f32 %v1138, %v1493
        %v1532 = vadd.f32 %v1143, %v1498
        %v1533 = vld [vmem:[%s6] sm:$0x1]
        %v1535 = vlaneseq
        %v1536 = vshrl.u32 %v1535, 7
        %v1537 = vsub.s32 0, %v1536
        %v1538 = vrot.slane %v1533, %v1537
        %v1540 = vadd.f32 %v1501, %v1538
        %v1541 = vadd.f32 %v1502, %v1538
        %v1542 = vadd.f32 %v1503, %v1538
        %v1543 = vadd.f32 %v1504, %v1538
        %v1544 = vadd.f32 %v1505, %v1538
        %v1545 = vadd.f32 %v1506, %v1538
        %v1546 = vadd.f32 %v1507, %v1538
        %v1547 = vadd.f32 %v1508, %v1538
        %v1548 = vadd.f32 %v1509, %v1538
        %v1549 = vadd.f32 %v1510, %v1538
        %v1550 = vadd.f32 %v1511, %v1538
        %v1551 = vadd.f32 %v1512, %v1538
        %v1552 = vadd.f32 %v1513, %v1538
        %v1553 = vadd.f32 %v1514, %v1538
        %v1554 = vadd.f32 %v1515, %v1538
        %v1555 = vadd.f32 %v1516, %v1538
        %v1556 = vadd.f32 %v1517, %v1538
        %v1557 = vadd.f32 %v1518, %v1538
        %v1558 = vadd.f32 %v1519, %v1538
        %v1559 = vadd.f32 %v1520, %v1538
        %v1560 = vadd.f32 %v1521, %v1538
        %v1561 = vadd.f32 %v1522, %v1538
        %v1562 = vadd.f32 %v1523, %v1538
        %v1563 = vadd.f32 %v1524, %v1538
        %v1564 = vadd.f32 %v1525, %v1538
        %v1565 = vadd.f32 %v1526, %v1538
        %v1566 = vadd.f32 %v1527, %v1538
        %v1567 = vadd.f32 %v1528, %v1538
        %v1568 = vadd.f32 %v1529, %v1538
        %v1569 = vadd.f32 %v1530, %v1538
        %v1570 = vadd.f32 %v1531, %v1538
        %v1571 = vadd.f32 %v1532, %v1538
        %v1572 = vmax.f32 %v1540, 0.0
        %v1573 = vmax.f32 %v1541, 0.0
        %v1574 = vmax.f32 %v1542, 0.0
        %v1575 = vmax.f32 %v1543, 0.0
        %v1576 = vmax.f32 %v1544, 0.0
        %v1577 = vmax.f32 %v1545, 0.0
        %v1578 = vmax.f32 %v1546, 0.0
        %v1579 = vmax.f32 %v1547, 0.0
        %v1580 = vmax.f32 %v1548, 0.0
        %v1581 = vmax.f32 %v1549, 0.0
        %v1582 = vmax.f32 %v1550, 0.0
        %v1583 = vmax.f32 %v1551, 0.0
        %v1584 = vmax.f32 %v1552, 0.0
        %v1585 = vmax.f32 %v1553, 0.0
        %v1586 = vmax.f32 %v1554, 0.0
        %v1587 = vmax.f32 %v1555, 0.0
        %v1588 = vmax.f32 %v1556, 0.0
        %v1589 = vmax.f32 %v1557, 0.0
        %v1590 = vmax.f32 %v1558, 0.0
        %v1591 = vmax.f32 %v1559, 0.0
        %v1592 = vmax.f32 %v1560, 0.0
        %v1593 = vmax.f32 %v1561, 0.0
        %v1594 = vmax.f32 %v1562, 0.0
        %v1595 = vmax.f32 %v1563, 0.0
        %v1596 = vmax.f32 %v1564, 0.0
        %v1597 = vmax.f32 %v1565, 0.0
        %v1598 = vmax.f32 %v1566, 0.0
        %v1599 = vmax.f32 %v1567, 0.0
        %v1600 = vmax.f32 %v1568, 0.0
        %v1601 = vmax.f32 %v1569, 0.0
        %v1602 = vmax.f32 %v1570, 0.0
        %v1603 = vmax.f32 %v1571, 0.0
        %v1604 = vld [vmem:[%s7] sm:$0xff]
        %v1605 = vld [vmem:[%s7 + $0x8] sm:$0xff]
        %v1606 = vld [vmem:[%s7 + $0x10] sm:$0xff]
        %v1607 = vld [vmem:[%s7 + $0x18] sm:$0xff]
        %v1608 = vld [vmem:[%s7 + $0x20] sm:$0xff]
        %v1609 = vld [vmem:[%s7 + $0x28] sm:$0xff]
        %v1610 = vld [vmem:[%s7 + $0x30] sm:$0xff]
        %v1611 = vld [vmem:[%s7 + $0x38] sm:$0xff]
        %v1612 = vld [vmem:[%s8] sm:$0x1]
        %v1614 = vlaneseq
        %v1615 = vshrl.u32 %v1614, 7
        %v1616 = vsub.s32 0, %v1615
        %v1617 = vrot.slane %v1612, %v1616
        %vm1619 = vcmask 523264
        %v1621 = vsel %vm1619, %v1572, 0
        %v1624 = vsel %vm1619, %v1573, 0
        %v1627 = vsel %vm1619, %v1574, 0
        %v1630 = vsel %vm1619, %v1575, 0
        %v1633 = vsel %vm1619, %v1576, 0
        %v1636 = vsel %vm1619, %v1577, 0
        %v1639 = vsel %vm1619, %v1578, 0
        %v1642 = vsel %vm1619, %v1579, 0
        %v1645 = vsel %vm1619, %v1580, 0
        %v1648 = vsel %vm1619, %v1581, 0
        %v1651 = vsel %vm1619, %v1582, 0
        %v1654 = vsel %vm1619, %v1583, 0
        %v1657 = vsel %vm1619, %v1584, 0
        %v1660 = vsel %vm1619, %v1585, 0
        %v1663 = vsel %vm1619, %v1586, 0
        %v1666 = vsel %vm1619, %v1587, 0
        %v1669 = vsel %vm1619, %v1588, 0
        %v1672 = vsel %vm1619, %v1589, 0
        %v1675 = vsel %vm1619, %v1590, 0
        %v1678 = vsel %vm1619, %v1591, 0
        %v1681 = vsel %vm1619, %v1592, 0
        %v1684 = vsel %vm1619, %v1593, 0
        %v1687 = vsel %vm1619, %v1594, 0
        %v1690 = vsel %vm1619, %v1595, 0
        %v1693 = vsel %vm1619, %v1596, 0
        %v1696 = vsel %vm1619, %v1597, 0
        %v1699 = vsel %vm1619, %v1598, 0
        %v1702 = vsel %vm1619, %v1599, 0
        %v1705 = vsel %vm1619, %v1600, 0
        %v1708 = vsel %vm1619, %v1601, 0
        %v1711 = vsel %vm1619, %v1602, 0
        %v1714 = vsel %vm1619, %v1603, 0
        %1716 = vmatprep.subr.mxu0 0.0
        %1717 = vmatpush1.msra.mxu0 0.0
        %1718 = vmatprep.subr.mxu0 0.0
        %1719 = vmatpush1.msra.mxu0 0.0
        %1720 = vmatprep.subr.mxu0 0.0
        %1721 = vmatpush1.msra.mxu0 0.0
        %1722 = vmatprep.subr.mxu0 0.0
        %1723 = vmatpush1.msra.mxu0 0.0
        %1724 = vmatprep.subr.mxu0 0.0
        %1725 = vmatpush1.msra.mxu0 0.0
        %1726 = vmatprep.subr.mxu0 0.0
        %1727 = vmatpush1.msra.mxu0 0.0
        %1728 = vmatprep.subr.mxu0 0.0
        %1729 = vmatpush1.msra.mxu0 0.0
        %1730 = vmatprep.subr.mxu0 0.0
        %1731 = vmatpush1.msra.mxu0 0.0
        %1732 = vmatprep.subr.mxu0 0.0
        %1733 = vmatpush1.msra.mxu0 %v1611
        %1734 = vmatprep.subr.mxu0 0.0
        %1735 = vmatpush1.msra.mxu0 %v1610
        %1736 = vmatprep.subr.mxu0 0.0
        %1737 = vmatpush1.msra.mxu0 %v1609
        %1738 = vmatprep.subr.mxu0 0.0
        %1739 = vmatpush1.msra.mxu0 %v1608
        %1740 = vmatprep.subr.mxu0 0.0
        %1741 = vmatpush1.msra.mxu0 %v1607
        %1742 = vmatprep.subr.mxu0 0.0
        %1743 = vmatpush1.msra.mxu0 %v1606
        %1744 = vmatprep.subr.mxu0 0.0
        %1745 = vmatpush1.msra.mxu0 %v1605
        %1746 = vmatprep.subr.mxu0 0.0
        %1747 = vmatpush1.msra.mxu0 %v1604
        %1748 = vmatprep.subr.mxu0 0.0
        %1749 = vmatpush2.msra.mxu0 0.0
        %1750 = vmatprep.subr.mxu0 0.0
        %1751 = vmatpush2.msra.mxu0 0.0
        %1752 = vmatprep.subr.mxu0 0.0
        %1753 = vmatpush2.msra.mxu0 0.0
        %1754 = vmatprep.subr.mxu0 0.0
        %1755 = vmatpush2.msra.mxu0 0.0
        %1756 = vmatprep.subr.mxu0 0.0
        %1757 = vmatpush2.msra.mxu0 0.0
        %1758 = vmatprep.subr.mxu0 0.0
        %1759 = vmatpush2.msra.mxu0 0.0
        %1760 = vmatprep.subr.mxu0 0.0
        %1761 = vmatpush2.msra.mxu0 0.0
        %1762 = vmatprep.subr.mxu0 0.0
        %1763 = vmatpush2.msra.mxu0 0.0
        %1764 = vmatprep.subr.mxu0 0.0
        %1765 = vmatpush2.msra.mxu0 0.0
        %1766 = vmatprep.subr.mxu0 0.0
        %1767 = vmatpush2.msra.mxu0 0.0
        %1768 = vmatprep.subr.mxu0 0.0
        %1769 = vmatpush2.msra.mxu0 0.0
        %1770 = vmatprep.subr.mxu0 0.0
        %1771 = vmatpush2.msra.mxu0 0.0
        %1772 = vmatprep.subr.mxu0 0.0
        %1773 = vmatpush2.msra.mxu0 0.0
        %1774 = vmatprep.subr.mxu0 0.0
        %1775 = vmatpush2.msra.mxu0 0.0
        %1776 = vmatprep.subr.mxu0 0.0
        %1777 = vmatpush2.msra.mxu0 0.0
        %1778 = vmatprep.subr.mxu0 0.0
        %1779 = vmatpush2.msra.mxu0 0.0
        %1780 = vmatprep.mubr.f32.mxu0 0.0
        %1781 = vmatmul.mubr.f32.gmra.mxu0 %v1621
        %v1782 = vpop.f32.mrf.mxu0
        %v1783 = vadd.f32 %v1617, %v1782
        %v1784 = vpop.f32.mrf.mxu0
        %1785 = vmatprep.mubr.f32.mxu0 0.0
        %1786 = vmatmul.mubr.f32.gmra.mxu0 %v1624
        %v1787 = vpop.f32.mrf.mxu0
        %v1788 = vadd.f32 %v1617, %v1787
        %v1789 = vpop.f32.mrf.mxu0
        %1790 = vmatprep.mubr.f32.mxu0 0.0
        %1791 = vmatmul.mubr.f32.gmra.mxu0 %v1627
        %v1792 = vpop.f32.mrf.mxu0
        %v1793 = vadd.f32 %v1617, %v1792
        %v1794 = vpop.f32.mrf.mxu0
        %1795 = vmatprep.mubr.f32.mxu0 0.0
        %1796 = vmatmul.mubr.f32.gmra.mxu0 %v1630
        %v1797 = vpop.f32.mrf.mxu0
        %v1798 = vadd.f32 %v1617, %v1797
        %v1799 = vpop.f32.mrf.mxu0
        %1800 = vmatprep.mubr.f32.mxu0 0.0
        %1801 = vmatmul.mubr.f32.gmra.mxu0 %v1633
        %v1802 = vpop.f32.mrf.mxu0
        %v1803 = vadd.f32 %v1617, %v1802
        %v1804 = vpop.f32.mrf.mxu0
        %1805 = vmatprep.mubr.f32.mxu0 0.0
        %1806 = vmatmul.mubr.f32.gmra.mxu0 %v1636
        %v1807 = vpop.f32.mrf.mxu0
        %v1808 = vadd.f32 %v1617, %v1807
        %v1809 = vpop.f32.mrf.mxu0
        %1810 = vmatprep.mubr.f32.mxu0 0.0
        %1811 = vmatmul.mubr.f32.gmra.mxu0 %v1639
        %v1812 = vpop.f32.mrf.mxu0
        %v1813 = vadd.f32 %v1617, %v1812
        %v1814 = vpop.f32.mrf.mxu0
        %1815 = vmatprep.mubr.f32.mxu0 0.0
        %1816 = vmatmul.mubr.f32.gmra.mxu0 %v1642
        %v1817 = vpop.f32.mrf.mxu0
        %v1818 = vadd.f32 %v1617, %v1817
        %v1819 = vpop.f32.mrf.mxu0
        %1820 = vmatprep.mubr.f32.mxu0 0.0
        %1821 = vmatmul.mubr.f32.gmra.mxu0 %v1645
        %v1822 = vpop.f32.mrf.mxu0
        %v1823 = vadd.f32 %v1617, %v1822
        %v1824 = vpop.f32.mrf.mxu0
        %1825 = vmatprep.mubr.f32.mxu0 0.0
        %1826 = vmatmul.mubr.f32.gmra.mxu0 %v1648
        %v1827 = vpop.f32.mrf.mxu0
        %v1828 = vadd.f32 %v1617, %v1827
        %v1829 = vpop.f32.mrf.mxu0
        %1830 = vmatprep.mubr.f32.mxu0 0.0
        %1831 = vmatmul.mubr.f32.gmra.mxu0 %v1651
        %v1832 = vpop.f32.mrf.mxu0
        %v1833 = vadd.f32 %v1617, %v1832
        %v1834 = vpop.f32.mrf.mxu0
        %1835 = vmatprep.mubr.f32.mxu0 0.0
        %1836 = vmatmul.mubr.f32.gmra.mxu0 %v1654
        %v1837 = vpop.f32.mrf.mxu0
        %v1838 = vadd.f32 %v1617, %v1837
        %v1839 = vpop.f32.mrf.mxu0
        %1840 = vmatprep.mubr.f32.mxu0 0.0
        %1841 = vmatmul.mubr.f32.gmra.mxu0 %v1657
        %v1842 = vpop.f32.mrf.mxu0
        %v1843 = vadd.f32 %v1617, %v1842
        %v1844 = vpop.f32.mrf.mxu0
        %1845 = vmatprep.mubr.f32.mxu0 0.0
        %1846 = vmatmul.mubr.f32.gmra.mxu0 %v1660
        %v1847 = vpop.f32.mrf.mxu0
        %v1848 = vadd.f32 %v1617, %v1847
        %v1849 = vpop.f32.mrf.mxu0
        %1850 = vmatprep.mubr.f32.mxu0 0.0
        %1851 = vmatmul.mubr.f32.gmra.mxu0 %v1663
        %v1852 = vpop.f32.mrf.mxu0
        %v1853 = vadd.f32 %v1617, %v1852
        %v1854 = vpop.f32.mrf.mxu0
        %1855 = vmatprep.mubr.f32.mxu0 0.0
        %1856 = vmatmul.mubr.f32.gmra.mxu0 %v1666
        %v1857 = vpop.f32.mrf.mxu0
        %v1858 = vadd.f32 %v1617, %v1857
        %v1859 = vpop.f32.mrf.mxu0
        %1860 = vmatprep.mubr.f32.mxu0 0.0
        %1861 = vmatmul.mubr.f32.gmra.mxu0 %v1669
        %v1862 = vpop.f32.mrf.mxu0
        %v1863 = vadd.f32 %v1617, %v1862
        %v1864 = vpop.f32.mrf.mxu0
        %1865 = vmatprep.mubr.f32.mxu0 0.0
        %1866 = vmatmul.mubr.f32.gmra.mxu0 %v1672
        %v1867 = vpop.f32.mrf.mxu0
        %v1868 = vadd.f32 %v1617, %v1867
        %v1869 = vpop.f32.mrf.mxu0
        %1870 = vmatprep.mubr.f32.mxu0 0.0
        %1871 = vmatmul.mubr.f32.gmra.mxu0 %v1675
        %v1872 = vpop.f32.mrf.mxu0
        %v1873 = vadd.f32 %v1617, %v1872
        %v1874 = vpop.f32.mrf.mxu0
        %1875 = vmatprep.mubr.f32.mxu0 0.0
        %1876 = vmatmul.mubr.f32.gmra.mxu0 %v1678
        %v1877 = vpop.f32.mrf.mxu0
        %v1878 = vadd.f32 %v1617, %v1877
        %v1879 = vpop.f32.mrf.mxu0
        %1880 = vmatprep.mubr.f32.mxu0 0.0
        %1881 = vmatmul.mubr.f32.gmra.mxu0 %v1681
        %v1882 = vpop.f32.mrf.mxu0
        %v1883 = vadd.f32 %v1617, %v1882
        %v1884 = vpop.f32.mrf.mxu0
        %1885 = vmatprep.mubr.f32.mxu0 0.0
        %1886 = vmatmul.mubr.f32.gmra.mxu0 %v1684
        %v1887 = vpop.f32.mrf.mxu0
        %v1888 = vadd.f32 %v1617, %v1887
        %v1889 = vpop.f32.mrf.mxu0
        %1890 = vmatprep.mubr.f32.mxu0 0.0
        %1891 = vmatmul.mubr.f32.gmra.mxu0 %v1687
        %v1892 = vpop.f32.mrf.mxu0
        %v1893 = vadd.f32 %v1617, %v1892
        %v1894 = vpop.f32.mrf.mxu0
        %1895 = vmatprep.mubr.f32.mxu0 0.0
        %1896 = vmatmul.mubr.f32.gmra.mxu0 %v1690
        %v1897 = vpop.f32.mrf.mxu0
        %v1898 = vadd.f32 %v1617, %v1897
        %v1899 = vpop.f32.mrf.mxu0
        %1900 = vmatprep.mubr.f32.mxu0 0.0
        %1901 = vmatmul.mubr.f32.gmra.mxu0 %v1693
        %v1902 = vpop.f32.mrf.mxu0
        %v1903 = vadd.f32 %v1617, %v1902
        %v1904 = vpop.f32.mrf.mxu0
        %1905 = vmatprep.mubr.f32.mxu0 0.0
        %1906 = vmatmul.mubr.f32.gmra.mxu0 %v1696
        %v1907 = vpop.f32.mrf.mxu0
        %v1908 = vadd.f32 %v1617, %v1907
        %v1909 = vpop.f32.mrf.mxu0
        %1910 = vmatprep.mubr.f32.mxu0 0.0
        %1911 = vmatmul.mubr.f32.gmra.mxu0 %v1699
        %v1912 = vpop.f32.mrf.mxu0
        %v1913 = vadd.f32 %v1617, %v1912
        %v1914 = vpop.f32.mrf.mxu0
        %1915 = vmatprep.mubr.f32.mxu0 0.0
        %1916 = vmatmul.mubr.f32.gmra.mxu0 %v1702
        %v1917 = vpop.f32.mrf.mxu0
        %v1918 = vadd.f32 %v1617, %v1917
        %v1919 = vpop.f32.mrf.mxu0
        %1920 = vmatprep.mubr.f32.mxu0 0.0
        %1921 = vmatmul.mubr.f32.gmra.mxu0 %v1705
        %v1922 = vpop.f32.mrf.mxu0
        %v1923 = vadd.f32 %v1617, %v1922
        %v1924 = vpop.f32.mrf.mxu0
        %1925 = vmatprep.mubr.f32.mxu0 0.0
        %1926 = vmatmul.mubr.f32.gmra.mxu0 %v1708
        %v1927 = vpop.f32.mrf.mxu0
        %v1928 = vadd.f32 %v1617, %v1927
        %v1929 = vpop.f32.mrf.mxu0
        %1930 = vmatprep.mubr.f32.mxu0 0.0
        %1931 = vmatmul.mubr.f32.gmra.mxu0 %v1711
        %v1932 = vpop.f32.mrf.mxu0
        %v1933 = vadd.f32 %v1617, %v1932
        %v1934 = vpop.f32.mrf.mxu0
        %1935 = vmatprep.mubr.f32.mxu0 0.0
        %1936 = vmatmul.mubr.f32.gmra.mxu0 %v1714
        %v1937 = vpop.f32.mrf.mxu0
        %v1938 = vadd.f32 %v1617, %v1937
        %v1939 = vpop.f32.mrf.mxu0
        %1940 = vdwg.mxu0
        %v1941 = vmax.f32 %v1783, 0.0
        %v1942 = vmax.f32 %v1788, 0.0
        %v1943 = vmax.f32 %v1793, 0.0
        %v1944 = vmax.f32 %v1798, 0.0
        %v1945 = vmax.f32 %v1803, 0.0
        %v1946 = vmax.f32 %v1808, 0.0
        %v1947 = vmax.f32 %v1813, 0.0
        %v1948 = vmax.f32 %v1818, 0.0
        %v1949 = vmax.f32 %v1823, 0.0
        %v1950 = vmax.f32 %v1828, 0.0
        %v1951 = vmax.f32 %v1833, 0.0
        %v1952 = vmax.f32 %v1838, 0.0
        %v1953 = vmax.f32 %v1843, 0.0
        %v1954 = vmax.f32 %v1848, 0.0
        %v1955 = vmax.f32 %v1853, 0.0
        %v1956 = vmax.f32 %v1858, 0.0
        %v1957 = vmax.f32 %v1863, 0.0
        %v1958 = vmax.f32 %v1868, 0.0
        %v1959 = vmax.f32 %v1873, 0.0
        %v1960 = vmax.f32 %v1878, 0.0
        %v1961 = vmax.f32 %v1883, 0.0
        %v1962 = vmax.f32 %v1888, 0.0
        %v1963 = vmax.f32 %v1893, 0.0
        %v1964 = vmax.f32 %v1898, 0.0
        %v1965 = vmax.f32 %v1903, 0.0
        %v1966 = vmax.f32 %v1908, 0.0
        %v1967 = vmax.f32 %v1913, 0.0
        %v1968 = vmax.f32 %v1918, 0.0
        %v1969 = vmax.f32 %v1923, 0.0
        %v1970 = vmax.f32 %v1928, 0.0
        %v1971 = vmax.f32 %v1933, 0.0
        %v1972 = vmax.f32 %v1938, 0.0
        %v1973 = vld [vmem:[%s9] sm:$0xff]
        %v1974 = vld [vmem:[%s9 + $0x8] sm:$0xff]
        %v1975 = vld [vmem:[%s9 + $0x10] sm:$0xff]
        %v1976 = vld [vmem:[%s9 + $0x18] sm:$0xff]
        %v1977 = vld [vmem:[%s10] sm:$0x1]
        %v1979 = vlaneseq
        %v1980 = vshrl.u32 %v1979, 7
        %v1981 = vsub.s32 0, %v1980
        %v1982 = vrot.slane %v1977, %v1981
        %v1985 = vsel %vm824, %v1941, 0
        %v1988 = vsel %vm824, %v1942, 0
        %v1991 = vsel %vm824, %v1943, 0
        %v1994 = vsel %vm824, %v1944, 0
        %v1997 = vsel %vm824, %v1945, 0
        %v2000 = vsel %vm824, %v1946, 0
        %v2003 = vsel %vm824, %v1947, 0
        %v2006 = vsel %vm824, %v1948, 0
        %v2009 = vsel %vm824, %v1949, 0
        %v2012 = vsel %vm824, %v1950, 0
        %v2015 = vsel %vm824, %v1951, 0
        %v2018 = vsel %vm824, %v1952, 0
        %v2021 = vsel %vm824, %v1953, 0
        %v2024 = vsel %vm824, %v1954, 0
        %v2027 = vsel %vm824, %v1955, 0
        %v2030 = vsel %vm824, %v1956, 0
        %v2033 = vsel %vm824, %v1957, 0
        %v2036 = vsel %vm824, %v1958, 0
        %v2039 = vsel %vm824, %v1959, 0
        %v2042 = vsel %vm824, %v1960, 0
        %v2045 = vsel %vm824, %v1961, 0
        %v2048 = vsel %vm824, %v1962, 0
        %v2051 = vsel %vm824, %v1963, 0
        %v2054 = vsel %vm824, %v1964, 0
        %v2057 = vsel %vm824, %v1965, 0
        %v2060 = vsel %vm824, %v1966, 0
        %v2063 = vsel %vm824, %v1967, 0
        %v2066 = vsel %vm824, %v1968, 0
        %v2069 = vsel %vm824, %v1969, 0
        %v2072 = vsel %vm824, %v1970, 0
        %v2075 = vsel %vm824, %v1971, 0
        %v2078 = vsel %vm824, %v1972, 0
        %2080 = vmatprep.subr.mxu0 0.0
        %2081 = vmatpush1.msra.mxu0 0.0
        %2082 = vmatprep.subr.mxu0 0.0
        %2083 = vmatpush1.msra.mxu0 0.0
        %2084 = vmatprep.subr.mxu0 0.0
        %2085 = vmatpush1.msra.mxu0 0.0
        %2086 = vmatprep.subr.mxu0 0.0
        %2087 = vmatpush1.msra.mxu0 0.0
        %2088 = vmatprep.subr.mxu0 0.0
        %2089 = vmatpush1.msra.mxu0 0.0
        %2090 = vmatprep.subr.mxu0 0.0
        %2091 = vmatpush1.msra.mxu0 0.0
        %2092 = vmatprep.subr.mxu0 0.0
        %2093 = vmatpush1.msra.mxu0 0.0
        %2094 = vmatprep.subr.mxu0 0.0
        %2095 = vmatpush1.msra.mxu0 0.0
        %2096 = vmatprep.subr.mxu0 0.0
        %2097 = vmatpush1.msra.mxu0 0.0
        %2098 = vmatprep.subr.mxu0 0.0
        %2099 = vmatpush1.msra.mxu0 0.0
        %2100 = vmatprep.subr.mxu0 0.0
        %2101 = vmatpush1.msra.mxu0 0.0
        %2102 = vmatprep.subr.mxu0 0.0
        %2103 = vmatpush1.msra.mxu0 0.0
        %2104 = vmatprep.subr.mxu0 0.0
        %2105 = vmatpush1.msra.mxu0 %v1976
        %2106 = vmatprep.subr.mxu0 0.0
        %2107 = vmatpush1.msra.mxu0 %v1975
        %2108 = vmatprep.subr.mxu0 0.0
        %2109 = vmatpush1.msra.mxu0 %v1974
        %2110 = vmatprep.subr.mxu0 0.0
        %2111 = vmatpush1.msra.mxu0 %v1973
        %2112 = vmatprep.subr.mxu0 0.0
        %2113 = vmatpush2.msra.mxu0 0.0
        %2114 = vmatprep.subr.mxu0 0.0
        %2115 = vmatpush2.msra.mxu0 0.0
        %2116 = vmatprep.subr.mxu0 0.0
        %2117 = vmatpush2.msra.mxu0 0.0
        %2118 = vmatprep.subr.mxu0 0.0
        %2119 = vmatpush2.msra.mxu0 0.0
        %2120 = vmatprep.subr.mxu0 0.0
        %2121 = vmatpush2.msra.mxu0 0.0
        %2122 = vmatprep.subr.mxu0 0.0
        %2123 = vmatpush2.msra.mxu0 0.0
        %2124 = vmatprep.subr.mxu0 0.0
        %2125 = vmatpush2.msra.mxu0 0.0
        %2126 = vmatprep.subr.mxu0 0.0
        %2127 = vmatpush2.msra.mxu0 0.0
        %2128 = vmatprep.subr.mxu0 0.0
        %2129 = vmatpush2.msra.mxu0 0.0
        %2130 = vmatprep.subr.mxu0 0.0
        %2131 = vmatpush2.msra.mxu0 0.0
        %2132 = vmatprep.subr.mxu0 0.0
        %2133 = vmatpush2.msra.mxu0 0.0
        %2134 = vmatprep.subr.mxu0 0.0
        %2135 = vmatpush2.msra.mxu0 0.0
        %2136 = vmatprep.subr.mxu0 0.0
        %2137 = vmatpush2.msra.mxu0 0.0
        %2138 = vmatprep.subr.mxu0 0.0
        %2139 = vmatpush2.msra.mxu0 0.0
        %2140 = vmatprep.subr.mxu0 0.0
        %2141 = vmatpush2.msra.mxu0 0.0
        %2142 = vmatprep.subr.mxu0 0.0
        %2143 = vmatpush2.msra.mxu0 0.0
        %2144 = vmatprep.mubr.f32.mxu0 0.0
        %2145 = vmatmul.mubr.f32.gmra.mxu0 %v1985
        %v2146 = vpop.f32.mrf.mxu0
        %v2147 = vadd.f32 %v1982, %v2146
        %v2148 = vpop.f32.mrf.mxu0
        %2149 = vmatprep.mubr.f32.mxu0 0.0
        %2150 = vmatmul.mubr.f32.gmra.mxu0 %v1988
        %v2151 = vpop.f32.mrf.mxu0
        %v2152 = vadd.f32 %v1982, %v2151
        %v2153 = vpop.f32.mrf.mxu0
        %2154 = vmatprep.mubr.f32.mxu0 0.0
        %2155 = vmatmul.mubr.f32.gmra.mxu0 %v1991
        %v2156 = vpop.f32.mrf.mxu0
        %v2157 = vadd.f32 %v1982, %v2156
        %v2158 = vpop.f32.mrf.mxu0
        %2159 = vmatprep.mubr.f32.mxu0 0.0
        %2160 = vmatmul.mubr.f32.gmra.mxu0 %v1994
        %v2161 = vpop.f32.mrf.mxu0
        %v2162 = vadd.f32 %v1982, %v2161
        %v2163 = vpop.f32.mrf.mxu0
        %2164 = vmatprep.mubr.f32.mxu0 0.0
        %2165 = vmatmul.mubr.f32.gmra.mxu0 %v1997
        %v2166 = vpop.f32.mrf.mxu0
        %v2167 = vadd.f32 %v1982, %v2166
        %v2168 = vpop.f32.mrf.mxu0
        %2169 = vmatprep.mubr.f32.mxu0 0.0
        %2170 = vmatmul.mubr.f32.gmra.mxu0 %v2000
        %v2171 = vpop.f32.mrf.mxu0
        %v2172 = vadd.f32 %v1982, %v2171
        %v2173 = vpop.f32.mrf.mxu0
        %2174 = vmatprep.mubr.f32.mxu0 0.0
        %2175 = vmatmul.mubr.f32.gmra.mxu0 %v2003
        %v2176 = vpop.f32.mrf.mxu0
        %v2177 = vadd.f32 %v1982, %v2176
        %v2178 = vpop.f32.mrf.mxu0
        %2179 = vmatprep.mubr.f32.mxu0 0.0
        %2180 = vmatmul.mubr.f32.gmra.mxu0 %v2006
        %v2181 = vpop.f32.mrf.mxu0
        %v2182 = vadd.f32 %v1982, %v2181
        %v2183 = vpop.f32.mrf.mxu0
        %2184 = vmatprep.mubr.f32.mxu0 0.0
        %2185 = vmatmul.mubr.f32.gmra.mxu0 %v2009
        %v2186 = vpop.f32.mrf.mxu0
        %v2187 = vadd.f32 %v1982, %v2186
        %v2188 = vpop.f32.mrf.mxu0
        %2189 = vmatprep.mubr.f32.mxu0 0.0
        %2190 = vmatmul.mubr.f32.gmra.mxu0 %v2012
        %v2191 = vpop.f32.mrf.mxu0
        %v2192 = vadd.f32 %v1982, %v2191
        %v2193 = vpop.f32.mrf.mxu0
        %2194 = vmatprep.mubr.f32.mxu0 0.0
        %2195 = vmatmul.mubr.f32.gmra.mxu0 %v2015
        %v2196 = vpop.f32.mrf.mxu0
        %v2197 = vadd.f32 %v1982, %v2196
        %v2198 = vpop.f32.mrf.mxu0
        %2199 = vmatprep.mubr.f32.mxu0 0.0
        %2200 = vmatmul.mubr.f32.gmra.mxu0 %v2018
        %v2201 = vpop.f32.mrf.mxu0
        %v2202 = vadd.f32 %v1982, %v2201
        %v2203 = vpop.f32.mrf.mxu0
        %2204 = vmatprep.mubr.f32.mxu0 0.0
        %2205 = vmatmul.mubr.f32.gmra.mxu0 %v2021
        %v2206 = vpop.f32.mrf.mxu0
        %v2207 = vadd.f32 %v1982, %v2206
        %v2208 = vpop.f32.mrf.mxu0
        %2209 = vmatprep.mubr.f32.mxu0 0.0
        %2210 = vmatmul.mubr.f32.gmra.mxu0 %v2024
        %v2211 = vpop.f32.mrf.mxu0
        %v2212 = vadd.f32 %v1982, %v2211
        %v2213 = vpop.f32.mrf.mxu0
        %2214 = vmatprep.mubr.f32.mxu0 0.0
        %2215 = vmatmul.mubr.f32.gmra.mxu0 %v2027
        %v2216 = vpop.f32.mrf.mxu0
        %v2217 = vadd.f32 %v1982, %v2216
        %v2218 = vpop.f32.mrf.mxu0
        %2219 = vmatprep.mubr.f32.mxu0 0.0
        %2220 = vmatmul.mubr.f32.gmra.mxu0 %v2030
        %v2221 = vpop.f32.mrf.mxu0
        %v2222 = vadd.f32 %v1982, %v2221
        %v2223 = vpop.f32.mrf.mxu0
        %2224 = vmatprep.mubr.f32.mxu0 0.0
        %2225 = vmatmul.mubr.f32.gmra.mxu0 %v2033
        %v2226 = vpop.f32.mrf.mxu0
        %v2227 = vadd.f32 %v1982, %v2226
        %v2228 = vpop.f32.mrf.mxu0
        %2229 = vmatprep.mubr.f32.mxu0 0.0
        %2230 = vmatmul.mubr.f32.gmra.mxu0 %v2036
        %v2231 = vpop.f32.mrf.mxu0
        %v2232 = vadd.f32 %v1982, %v2231
        %v2233 = vpop.f32.mrf.mxu0
        %2234 = vmatprep.mubr.f32.mxu0 0.0
        %2235 = vmatmul.mubr.f32.gmra.mxu0 %v2039
        %v2236 = vpop.f32.mrf.mxu0
        %v2237 = vadd.f32 %v1982, %v2236
        %v2238 = vpop.f32.mrf.mxu0
        %2239 = vmatprep.mubr.f32.mxu0 0.0
        %2240 = vmatmul.mubr.f32.gmra.mxu0 %v2042
        %v2241 = vpop.f32.mrf.mxu0
        %v2242 = vadd.f32 %v1982, %v2241
        %v2243 = vpop.f32.mrf.mxu0
        %2244 = vmatprep.mubr.f32.mxu0 0.0
        %2245 = vmatmul.mubr.f32.gmra.mxu0 %v2045
        %v2246 = vpop.f32.mrf.mxu0
        %v2247 = vadd.f32 %v1982, %v2246
        %v2248 = vpop.f32.mrf.mxu0
        %2249 = vmatprep.mubr.f32.mxu0 0.0
        %2250 = vmatmul.mubr.f32.gmra.mxu0 %v2048
        %v2251 = vpop.f32.mrf.mxu0
        %v2252 = vadd.f32 %v1982, %v2251
        %v2253 = vpop.f32.mrf.mxu0
        %2254 = vmatprep.mubr.f32.mxu0 0.0
        %2255 = vmatmul.mubr.f32.gmra.mxu0 %v2051
        %v2256 = vpop.f32.mrf.mxu0
        %v2257 = vadd.f32 %v1982, %v2256
        %v2258 = vpop.f32.mrf.mxu0
        %2259 = vmatprep.mubr.f32.mxu0 0.0
        %2260 = vmatmul.mubr.f32.gmra.mxu0 %v2054
        %v2261 = vpop.f32.mrf.mxu0
        %v2262 = vadd.f32 %v1982, %v2261
        %v2263 = vpop.f32.mrf.mxu0
        %2264 = vmatprep.mubr.f32.mxu0 0.0
        %2265 = vmatmul.mubr.f32.gmra.mxu0 %v2057
        %v2266 = vpop.f32.mrf.mxu0
        %v2267 = vadd.f32 %v1982, %v2266
        %v2268 = vpop.f32.mrf.mxu0
        %2269 = vmatprep.mubr.f32.mxu0 0.0
        %2270 = vmatmul.mubr.f32.gmra.mxu0 %v2060
        %v2271 = vpop.f32.mrf.mxu0
        %v2272 = vadd.f32 %v1982, %v2271
        %v2273 = vpop.f32.mrf.mxu0
        %2274 = vmatprep.mubr.f32.mxu0 0.0
        %2275 = vmatmul.mubr.f32.gmra.mxu0 %v2063
        %v2276 = vpop.f32.mrf.mxu0
        %v2277 = vadd.f32 %v1982, %v2276
        %v2278 = vpop.f32.mrf.mxu0
        %2279 = vmatprep.mubr.f32.mxu0 0.0
        %2280 = vmatmul.mubr.f32.gmra.mxu0 %v2066
        %v2281 = vpop.f32.mrf.mxu0
        %v2282 = vadd.f32 %v1982, %v2281
        %v2283 = vpop.f32.mrf.mxu0
        %2284 = vmatprep.mubr.f32.mxu0 0.0
        %2285 = vmatmul.mubr.f32.gmra.mxu0 %v2069
        %v2286 = vpop.f32.mrf.mxu0
        %v2287 = vadd.f32 %v1982, %v2286
        %v2288 = vpop.f32.mrf.mxu0
        %2289 = vmatprep.mubr.f32.mxu0 0.0
        %2290 = vmatmul.mubr.f32.gmra.mxu0 %v2072
        %v2291 = vpop.f32.mrf.mxu0
        %v2292 = vadd.f32 %v1982, %v2291
        %v2293 = vpop.f32.mrf.mxu0
        %2294 = vmatprep.mubr.f32.mxu0 0.0
        %2295 = vmatmul.mubr.f32.gmra.mxu0 %v2075
        %v2296 = vpop.f32.mrf.mxu0
        %v2297 = vadd.f32 %v1982, %v2296
        %v2298 = vpop.f32.mrf.mxu0
        %2299 = vmatprep.mubr.f32.mxu0 0.0
        %2300 = vmatmul.mubr.f32.gmra.mxu0 %v2078
        %v2301 = vpop.f32.mrf.mxu0
        %v2302 = vadd.f32 %v1982, %v2301
        %v2303 = vpop.f32.mrf.mxu0
        %2304 = vdwg.mxu0
        %v2305 = vmul.f32 %v2147, %v2147
        %v2306 = vmul.f32 %v2152, %v2152
        %v2307 = vmul.f32 %v2157, %v2157
        %v2308 = vmul.f32 %v2162, %v2162
        %v2309 = vmul.f32 %v2167, %v2167
        %v2310 = vmul.f32 %v2172, %v2172
        %v2311 = vmul.f32 %v2177, %v2177
        %v2312 = vmul.f32 %v2182, %v2182
        %v2313 = vmul.f32 %v2187, %v2187
        %v2314 = vmul.f32 %v2192, %v2192
        %v2315 = vmul.f32 %v2197, %v2197
        %v2316 = vmul.f32 %v2202, %v2202
        %v2317 = vmul.f32 %v2207, %v2207
        %v2318 = vmul.f32 %v2212, %v2212
        %v2319 = vmul.f32 %v2217, %v2217
        %v2320 = vmul.f32 %v2222, %v2222
        %v2321 = vmul.f32 %v2227, %v2227
        %v2322 = vmul.f32 %v2232, %v2232
        %v2323 = vmul.f32 %v2237, %v2237
        %v2324 = vmul.f32 %v2242, %v2242
        %v2325 = vmul.f32 %v2247, %v2247
        %v2326 = vmul.f32 %v2252, %v2252
        %v2327 = vmul.f32 %v2257, %v2257
        %v2328 = vmul.f32 %v2262, %v2262
        %v2329 = vmul.f32 %v2267, %v2267
        %v2330 = vmul.f32 %v2272, %v2272
        %v2331 = vmul.f32 %v2277, %v2277
        %v2332 = vmul.f32 %v2282, %v2282
        %v2333 = vmul.f32 %v2287, %v2287
        %v2334 = vmul.f32 %v2292, %v2292
        %v2335 = vmul.f32 %v2297, %v2297
        %v2336 = vmul.f32 %v2302, %v2302
        %2337 = vadd.xlane.f32.xlu0 %v2305
        %v2338 = vpop.xlane.xlu0 %2337
        %2339 = vadd.xlane.f32.xlu0 %v2306
        %v2340 = vpop.xlane.xlu0 %2339
        %2341 = vadd.xlane.f32.xlu0 %v2307
        %v2342 = vpop.xlane.xlu0 %2341
        %2343 = vadd.xlane.f32.xlu0 %v2308
        %v2344 = vpop.xlane.xlu0 %2343
        %2345 = vadd.xlane.f32.xlu0 %v2309
        %v2346 = vpop.xlane.xlu0 %2345
        %2347 = vadd.xlane.f32.xlu0 %v2310
        %v2348 = vpop.xlane.xlu0 %2347
        %2349 = vadd.xlane.f32.xlu0 %v2311
        %v2350 = vpop.xlane.xlu0 %2349
        %2351 = vadd.xlane.f32.xlu0 %v2312
        %v2352 = vpop.xlane.xlu0 %2351
        %2353 = vadd.xlane.f32.xlu0 %v2313
        %v2354 = vpop.xlane.xlu0 %2353
        %2355 = vadd.xlane.f32.xlu0 %v2314
        %v2356 = vpop.xlane.xlu0 %2355
        %2357 = vadd.xlane.f32.xlu0 %v2315
        %v2358 = vpop.xlane.xlu0 %2357
        %2359 = vadd.xlane.f32.xlu0 %v2316
        %v2360 = vpop.xlane.xlu0 %2359
        %2361 = vadd.xlane.f32.xlu0 %v2317
        %v2362 = vpop.xlane.xlu0 %2361
        %2363 = vadd.xlane.f32.xlu0 %v2318
        %v2364 = vpop.xlane.xlu0 %2363
        %2365 = vadd.xlane.f32.xlu0 %v2319
        %v2366 = vpop.xlane.xlu0 %2365
        %2367 = vadd.xlane.f32.xlu0 %v2320
        %v2368 = vpop.xlane.xlu0 %2367
        %2369 = vadd.xlane.f32.xlu0 %v2321
        %v2370 = vpop.xlane.xlu0 %2369
        %2371 = vadd.xlane.f32.xlu0 %v2322
        %v2372 = vpop.xlane.xlu0 %2371
        %2373 = vadd.xlane.f32.xlu0 %v2323
        %v2374 = vpop.xlane.xlu0 %2373
        %2375 = vadd.xlane.f32.xlu0 %v2324
        %v2376 = vpop.xlane.xlu0 %2375
        %2377 = vadd.xlane.f32.xlu0 %v2325
        %v2378 = vpop.xlane.xlu0 %2377
        %2379 = vadd.xlane.f32.xlu0 %v2326
        %v2380 = vpop.xlane.xlu0 %2379
        %2381 = vadd.xlane.f32.xlu0 %v2327
        %v2382 = vpop.xlane.xlu0 %2381
        %2383 = vadd.xlane.f32.xlu0 %v2328
        %v2384 = vpop.xlane.xlu0 %2383
        %2385 = vadd.xlane.f32.xlu0 %v2329
        %v2386 = vpop.xlane.xlu0 %2385
        %2387 = vadd.xlane.f32.xlu0 %v2330
        %v2388 = vpop.xlane.xlu0 %2387
        %2389 = vadd.xlane.f32.xlu0 %v2331
        %v2390 = vpop.xlane.xlu0 %2389
        %2391 = vadd.xlane.f32.xlu0 %v2332
        %v2392 = vpop.xlane.xlu0 %2391
        %2393 = vadd.xlane.f32.xlu0 %v2333
        %v2394 = vpop.xlane.xlu0 %2393
        %2395 = vadd.xlane.f32.xlu0 %v2334
        %v2396 = vpop.xlane.xlu0 %2395
        %2397 = vadd.xlane.f32.xlu0 %v2335
        %v2398 = vpop.xlane.xlu0 %2397
        %2399 = vadd.xlane.f32.xlu0 %v2336
        %v2400 = vpop.xlane.xlu0 %2399
        %v2401 = vmax.f32 %v2338, 1e-24
        %v2402 = vmax.f32 %v2340, 1e-24
        %v2403 = vmax.f32 %v2342, 1e-24
        %v2404 = vmax.f32 %v2344, 1e-24
        %v2405 = vmax.f32 %v2346, 1e-24
        %v2406 = vmax.f32 %v2348, 1e-24
        %v2407 = vmax.f32 %v2350, 1e-24
        %v2408 = vmax.f32 %v2352, 1e-24
        %v2409 = vmax.f32 %v2354, 1e-24
        %v2410 = vmax.f32 %v2356, 1e-24
        %v2411 = vmax.f32 %v2358, 1e-24
        %v2412 = vmax.f32 %v2360, 1e-24
        %v2413 = vmax.f32 %v2362, 1e-24
        %v2414 = vmax.f32 %v2364, 1e-24
        %v2415 = vmax.f32 %v2366, 1e-24
        %v2416 = vmax.f32 %v2368, 1e-24
        %v2417 = vmax.f32 %v2370, 1e-24
        %v2418 = vmax.f32 %v2372, 1e-24
        %v2419 = vmax.f32 %v2374, 1e-24
        %v2420 = vmax.f32 %v2376, 1e-24
        %v2421 = vmax.f32 %v2378, 1e-24
        %v2422 = vmax.f32 %v2380, 1e-24
        %v2423 = vmax.f32 %v2382, 1e-24
        %v2424 = vmax.f32 %v2384, 1e-24
        %v2425 = vmax.f32 %v2386, 1e-24
        %v2426 = vmax.f32 %v2388, 1e-24
        %v2427 = vmax.f32 %v2390, 1e-24
        %v2428 = vmax.f32 %v2392, 1e-24
        %v2429 = vmax.f32 %v2394, 1e-24
        %v2430 = vmax.f32 %v2396, 1e-24
        %v2431 = vmax.f32 %v2398, 1e-24
        %v2432 = vmax.f32 %v2400, 1e-24
        %v2433 = vrsqrt.pop %v2401
        %v2434 = vrsqrt.pop %v2402
        %v2435 = vrsqrt.pop %v2403
        %v2436 = vrsqrt.pop %v2404
        %v2437 = vrsqrt.pop %v2405
        %v2438 = vrsqrt.pop %v2406
        %v2439 = vrsqrt.pop %v2407
        %v2440 = vrsqrt.pop %v2408
        %v2441 = vrsqrt.pop %v2409
        %v2442 = vrsqrt.pop %v2410
        %v2443 = vrsqrt.pop %v2411
        %v2444 = vrsqrt.pop %v2412
        %v2445 = vrsqrt.pop %v2413
        %v2446 = vrsqrt.pop %v2414
        %v2447 = vrsqrt.pop %v2415
        %v2448 = vrsqrt.pop %v2416
        %v2449 = vrsqrt.pop %v2417
        %v2450 = vrsqrt.pop %v2418
        %v2451 = vrsqrt.pop %v2419
        %v2452 = vrsqrt.pop %v2420
        %v2453 = vrsqrt.pop %v2421
        %v2454 = vrsqrt.pop %v2422
        %v2455 = vrsqrt.pop %v2423
        %v2456 = vrsqrt.pop %v2424
        %v2457 = vrsqrt.pop %v2425
        %v2458 = vrsqrt.pop %v2426
        %v2459 = vrsqrt.pop %v2427
        %v2460 = vrsqrt.pop %v2428
        %v2461 = vrsqrt.pop %v2429
        %v2462 = vrsqrt.pop %v2430
        %v2463 = vrsqrt.pop %v2431
        %v2464 = vrsqrt.pop %v2432
        %v2465 = vmul.f32 %v2147, %v2433
        %v2466 = vmul.f32 %v2152, %v2434
        %v2467 = vmul.f32 %v2157, %v2435
        %v2468 = vmul.f32 %v2162, %v2436
        %v2469 = vmul.f32 %v2167, %v2437
        %v2470 = vmul.f32 %v2172, %v2438
        %v2471 = vmul.f32 %v2177, %v2439
        %v2472 = vmul.f32 %v2182, %v2440
        %v2473 = vmul.f32 %v2187, %v2441
        %v2474 = vmul.f32 %v2192, %v2442
        %v2475 = vmul.f32 %v2197, %v2443
        %v2476 = vmul.f32 %v2202, %v2444
        %v2477 = vmul.f32 %v2207, %v2445
        %v2478 = vmul.f32 %v2212, %v2446
        %v2479 = vmul.f32 %v2217, %v2447
        %v2480 = vmul.f32 %v2222, %v2448
        %v2481 = vmul.f32 %v2227, %v2449
        %v2482 = vmul.f32 %v2232, %v2450
        %v2483 = vmul.f32 %v2237, %v2451
        %v2484 = vmul.f32 %v2242, %v2452
        %v2485 = vmul.f32 %v2247, %v2453
        %v2486 = vmul.f32 %v2252, %v2454
        %v2487 = vmul.f32 %v2257, %v2455
        %v2488 = vmul.f32 %v2262, %v2456
        %v2489 = vmul.f32 %v2267, %v2457
        %v2490 = vmul.f32 %v2272, %v2458
        %v2491 = vmul.f32 %v2277, %v2459
        %v2492 = vmul.f32 %v2282, %v2460
        %v2493 = vmul.f32 %v2287, %v2461
        %v2494 = vmul.f32 %v2292, %v2462
        %v2495 = vmul.f32 %v2297, %v2463
        %v2496 = vmul.f32 %v2302, %v2464
        %2497 = vst [vmem:[%s412] sm:$0xff] %v2465
        %2498 = vst [vmem:[%s412 + $0x8] sm:$0xff] %v2466
        %2499 = vst [vmem:[%s412 + $0x10] sm:$0xff] %v2467
        %2500 = vst [vmem:[%s412 + $0x18] sm:$0xff] %v2468
        %2501 = vst [vmem:[%s412 + $0x20] sm:$0xff] %v2469
        %2502 = vst [vmem:[%s412 + $0x28] sm:$0xff] %v2470
        %2503 = vst [vmem:[%s412 + $0x30] sm:$0xff] %v2471
        %2504 = vst [vmem:[%s412 + $0x38] sm:$0xff] %v2472
        %2505 = vst [vmem:[%s412 + $0x40] sm:$0xff] %v2473
        %2506 = vst [vmem:[%s412 + $0x48] sm:$0xff] %v2474
        %2507 = vst [vmem:[%s412 + $0x50] sm:$0xff] %v2475
        %2508 = vst [vmem:[%s412 + $0x58] sm:$0xff] %v2476
        %2509 = vst [vmem:[%s412 + $0x60] sm:$0xff] %v2477
        %2510 = vst [vmem:[%s412 + $0x68] sm:$0xff] %v2478
        %2511 = vst [vmem:[%s412 + $0x70] sm:$0xff] %v2479
        %2512 = vst [vmem:[%s412 + $0x78] sm:$0xff] %v2480
        %2513 = vst [vmem:[%s412 + $0x80] sm:$0xff] %v2481
        %2514 = vst [vmem:[%s412 + $0x88] sm:$0xff] %v2482
        %2515 = vst [vmem:[%s412 + $0x90] sm:$0xff] %v2483
        %2516 = vst [vmem:[%s412 + $0x98] sm:$0xff] %v2484
        %2517 = vst [vmem:[%s412 + $0xa0] sm:$0xff] %v2485
        %2518 = vst [vmem:[%s412 + $0xa8] sm:$0xff] %v2486
        %2519 = vst [vmem:[%s412 + $0xb0] sm:$0xff] %v2487
        %2520 = vst [vmem:[%s412 + $0xb8] sm:$0xff] %v2488
        %2521 = vst [vmem:[%s412 + $0xc0] sm:$0xff] %v2489
        %2522 = vst [vmem:[%s412 + $0xc8] sm:$0xff] %v2490
        %2523 = vst [vmem:[%s412 + $0xd0] sm:$0xff] %v2491
        %2524 = vst [vmem:[%s412 + $0xd8] sm:$0xff] %v2492
        %2525 = vst [vmem:[%s412 + $0xe0] sm:$0xff] %v2493
        %2526 = vst [vmem:[%s412 + $0xe8] sm:$0xff] %v2494
        %2527 = vst [vmem:[%s412 + $0xf0] sm:$0xff] %v2495
        %2528 = vst [vmem:[%s412 + $0xf8] sm:$0xff] %v2496
        %s2529 = sand.u32 %s279, 1
        %s2530 = scalar_lea.sflag [#allocation3], %s2529
        %s2531 = sand.u32 %s279, 1
        %s2532 = smul.addr %s2531, 256
        %s2533 = scalar_lea.vmem [#allocation2], %s2532
        // Predicated region
        $region65: #{tpu_custom_call.1} parent=63 // pred_check
          %p2534 = pneg %p289
        $region66: #{tpu_custom_call.1} parent=63 // pred_check_branch
          %2536 = sbr.rel (%p2534) target = $region68
        $region67: #{tpu_custom_call.1} parent=63 // pred_region
          %s2537 = smul.u32 32, %s25
          %s2539 = ssub.s32 4096, 4096
          %2540 = vsyncadd %s2530, %s2539
          %s2541 = smul.addr %s2537, 128
          %s2542 = scalar_lea.hbm %s11, %s2541
          %s2543 = sshll.u32 %s2533, 4
          %s2544 = int_to_ptr.vmem [resolvable:$true] %s2543
          %2549 = dma.vmem_to_hbm [thread:$0]  %s2544, 4096, %s2542, %s2530, 128, 128, 8
        $region68: #{tpu_custom_call.1} parent=63 // pred_fallthru
          _
      $region64: #{tpu_custom_call.1} parent=5 // pred_fallthru
        _
      %p2550 = scmp.le.s32.totalorder 2, %s20
      // Predicated region
      $region69: #{tpu_custom_call.1} parent=5 // pred_check
        %p2551 = pneg %p2550
      $region70: #{tpu_custom_call.1} parent=5 // pred_check_branch
        %2553 = sbr.rel (%p2551) target = $region72
      $region71: #{tpu_custom_call.1} parent=5 // pred_region
        %s2554 = ssub.s32 %s20, 2
        // Predicated region
        $region73: #{tpu_custom_call.1} parent=71 // pred_check
          %p2555 = pneg %p295
        $region74: #{tpu_custom_call.1} parent=71 // pred_check_branch
          %2557 = sbr.rel (%p2555) target = $region76
        $region75: #{tpu_custom_call.1} parent=71 // pred_region
          %s2558 = sand.u32 %s280, 1
          %s2559 = scalar_lea.sflag [#allocation3], %s2558
          %s2560 = sand.u32 %s280, 1
          %s2561 = smul.addr %s2560, 256
          %s2562 = scalar_lea.vmem [#allocation2], %s2561
          %2563 = dma.done %s2559, 4096
        $region76: #{tpu_custom_call.1} parent=71 // pred_fallthru
          _
      $region72: #{tpu_custom_call.1} parent=5 // pred_fallthru
        _
    $region6: #{tpu_custom_call.1} parent=1 // loop_footer
      %s24 = sadd.s32 1, %s20
    $region7: #{tpu_custom_call.1} parent=1 // loop_footer_branch
      %19 = sbr.rel target = $region3
    $region8: #{tpu_custom_call.1} parent=1 // loop_exit
      _
    %2564 = vsyncpa [#allocation3], 1
    %s2565 = scalar_lea.sflag [#allocation3], 1
    %2566 = vsyncpa %s2565, 1

</llo_original>
